<compile_context>
chip_gen: v6e
topology: v6e:2x2x1
jax: 0.10.0
libtpu: 0.0.40
codegen_flags: <defaults>
</compile_context>

<pallas_src>
import functools

import jax
import jax.numpy as jnp
from jax.experimental import pallas as pl
from jax.experimental.pallas import tpu as pltpu

DEFAULT_COMPUTE_DTYPE = jnp.bfloat16
_FALLBACK_VMEM_LIMIT = 48 * 1024 * 1024


def _vmem_limit_bytes(default=_FALLBACK_VMEM_LIMIT):
    """~85% of physical VMEM (v5e/v6e: 128 MiB -> ~108 MiB, v7x: 64 MiB -> ~54 MiB)."""
    try:
        info = pltpu.get_tpu_info()
        cap = getattr(info, "vmem_capacity_bytes", None)
        if cap:
            return int(cap * 0.85)
    except Exception:
        pass
    return default


def _pick_tile(n, max_tile):
    """Largest 128-multiple tile dividing n (capped), else the full extent."""
    for t in (512, 384, 256, 128):
        if t <= max_tile and n % t == 0:
            return t
    # TODO(synk): pad + mask remainder tiles for ragged N instead of full-extent.
    return n


def _head_group(num_heads, head_dim, target_lanes=256):
    """Heads per pass-1 column group so the f32 accumulator stays ~<=256 lanes."""
    hg = max(1, min(num_heads, target_lanes // max(head_dim, 1)))
    while num_heads % hg:
        hg -= 1
    return hg


# ---------------------------------------------------------------------------
# Pass 1: K/V projection, column-tiled by head group, head-major output.
# ---------------------------------------------------------------------------
def _kv_proj_kernel(x_ref, wk_ref, wv_ref, k_ref, v_ref):
    x = x_ref[0]                       # (tn, C)  bf16
    hg = k_ref.shape[1]
    d = k_ref.shape[3]

    # (tn, C) @ (C, hg*D) with f32 accumulation; bounded accumulator (no spill).
    kg = jnp.dot(x, wk_ref[0], preferred_element_type=jnp.float32)
    for hh in range(hg):               # split lanes into heads once, here,
        k_ref[0, hh] = kg[:, hh * d:(hh + 1) * d].astype(k_ref.dtype)

    vg = jnp.dot(x, wv_ref[0], preferred_element_type=jnp.float32)
    for hh in range(hg):
        v_ref[0, hh] = vg[:, hh * d:(hh + 1) * d].astype(v_ref.dtype)


# ---------------------------------------------------------------------------
# Pass 2: fused Q projection + flash attention (online softmax over KV tiles)
#         + output projection.
# ---------------------------------------------------------------------------
def _flash_attn_proj_kernel(x_ref, wq_ref, k_ref, v_ref, wproj_ref, bproj_ref,
                            o_ref, q_scr, m_scr, l_scr, acc_scr, *, num_heads):
    kv = pl.program_id(2)
    last_kv = pl.num_programs(2) - 1

    @pl.when(kv == 0)
    def _init():
        m_scr[...] = jnp.full(m_scr.shape, -jnp.inf, dtype=m_scr.dtype)
        l_scr[...] = jnp.zeros(l_scr.shape, dtype=l_scr.dtype)
        acc_scr[...] = jnp.zeros(acc_scr.shape, dtype=acc_scr.dtype)
        # Q projection once per q-tile; softmax scale is pre-folded into Wq.
        xq = x_ref[0]                                      # (tq, C) bf16
        for h in range(num_heads):
            q_scr[h] = jnp.dot(xq, wq_ref[h],
                               preferred_element_type=jnp.float32
                               ).astype(q_scr.dtype)       # (tq, D)

    q = q_scr[...]                      # (H, tq, D) bf16
    k = k_ref[0]                        # (H, tk, D) bf16 (head-major, no reshape)
    v = v_ref[0]                        # (H, tk, D) bf16

    # Scores for all heads, bounded to this KV tile: (H, tq, tk) f32 on the MXU.
    s = jnp.einsum("hqd,hkd->hqk", q, k, preferred_element_type=jnp.float32)

    # Online (flash) softmax update.
    m_prev = m_scr[...]
    m_new = jnp.maximum(m_prev, jnp.max(s, axis=-1, keepdims=True))
    alpha = jnp.exp(m_prev - m_new)
    p = jnp.exp(s - m_new)
    l_scr[...] = alpha * l_scr[...] + jnp.sum(p, axis=-1, keepdims=True)
    acc_scr[...] = alpha * acc_scr[...] + jnp.einsum(
        "hqk,hkd->hqd", p.astype(v.dtype), v, preferred_element_type=jnp.float32)
    m_scr[...] = m_new

    @pl.when(kv == last_kv)
    def _finalize():
        tq, c = o_ref.shape[1], o_ref.shape[2]
        # Normalize (EUP approx reciprocal; documented ~1e-3-level extra error).
        o = (acc_scr[...] * pl.reciprocal(l_scr[...], approx=True)
             ).astype(wproj_ref.dtype)                     # (H, tq, D) bf16
        # Output projection: contract (h, d) jointly via per-head accumulation
        # against Wproj prepared as (H, D, C) -> no (tq, H, D)->(tq, C) relayout.
        res = jnp.zeros((tq, c), jnp.float32)
        for h in range(num_heads):
            res = res + jnp.dot(o[h], wproj_ref[h],
                                preferred_element_type=jnp.float32)
        o_ref[0] = (res + bproj_ref[...]).astype(o_ref.dtype)


# ---------------------------------------------------------------------------
# One-time weight preparation (outside the hot call path).
# ---------------------------------------------------------------------------
def prepare_attention_params(w_qkv, w_proj, b_proj, *, num_heads,
                             compute_dtype=DEFAULT_COMPUTE_DTYPE):
    """PyTorch Linear layout (out, in) -> x@W layouts:
         wq_hcd   (H, C, D)        softmax scale folded in
         wk_g/wv_g (G, C, Hg*D)    head-group column blocks for pass 1
         wproj_hdc (H, D, C)       per-head output-projection slices
         bproj    (1, C) f32
    """
    dim = w_proj.shape[0]
    head_dim = dim // num_heads
    scale = head_dim ** (-0.5)
    hg = _head_group(num_heads, head_dim)
    n_groups = num_heads // hg

    wqkv_t = jnp.asarray(w_qkv, jnp.float32).T              # (C, 3C) = [Q | K | V]

    wq = wqkv_t[:, :dim] * scale                             # fold q-scale (free)
    wq_hcd = wq.reshape(dim, num_heads, head_dim).transpose(1, 0, 2)
    wq_hcd = wq_hcd.astype(compute_dtype)

    def group_cols(cols):
        g = cols.reshape(dim, n_groups, hg * head_dim).transpose(1, 0, 2)
        return g.astype(compute_dtype)

    wk_g = group_cols(wqkv_t[:, dim:2 * dim])
    wv_g = group_cols(wqkv_t[:, 2 * dim:3 * dim])

    wproj_hdc = jnp.asarray(w_proj, jnp.float32).T.reshape(
        num_heads, head_dim, dim).astype(compute_dtype)
    bproj = jnp.asarray(b_proj, jnp.float32).reshape(1, dim)
    return wq_hcd, wk_g, wv_g, wproj_hdc, bproj


def _forward_impl(x, params, *, num_heads, single_buffer_weights):
    wq_hcd, wk_g, wv_g, wproj_hdc, bproj = params
    B, N, C = x.shape
    head_dim = C // num_heads
    compute_dtype = wq_hcd.dtype
    n_groups = wk_g.shape[0]
    hg = num_heads // n_groups

    tn = _pick_tile(N, 256)     # sequence tile for the KV projection
    tq = _pick_tile(N, 256)     # query tile
    tk = _pick_tile(N, 512)     # key/value tile (flash reduction axis)
    vmem_limit = _vmem_limit_bytes()

    x_c = x.astype(compute_dtype)

    def const_spec(shape, index_map):
        # Constant-index weight blocks: single-buffer to save VMEM.
        if single_buffer_weights:
            return pl.BlockSpec(shape, index_map,
                                pipeline_mode=pl.Buffered(buffer_count=1))
        return pl.BlockSpec(shape, index_map)

    # ---- pass 1: K/V projection, head-major output ------------------------
    k, v = pl.pallas_call(
        _kv_proj_kernel,
        out_shape=(
            jax.ShapeDtypeStruct((B, num_heads, N, head_dim), compute_dtype),
            jax.ShapeDtypeStruct((B, num_heads, N, head_dim), compute_dtype),
        ),
        grid_spec=pltpu.PrefetchScalarGridSpec(
            num_scalar_prefetch=0,
            grid=(B, N // tn, n_groups),
            in_specs=[
                pl.BlockSpec((1, tn, C), lambda b, i, g: (b, i, 0)),
                pl.BlockSpec((1, C, hg * head_dim), lambda b, i, g: (g, 0, 0)),
                pl.BlockSpec((1, C, hg * head_dim), lambda b, i, g: (g, 0, 0)),
            ],
            out_specs=[
                pl.BlockSpec((1, hg, tn, head_dim), lambda b, i, g: (b, g, i, 0)),
                pl.BlockSpec((1, hg, tn, head_dim), lambda b, i, g: (b, g, i, 0)),
            ],
        ),
        compiler_params=pltpu.CompilerParams(
            dimension_semantics=("parallel", "parallel", "parallel"),
            vmem_limit_bytes=vmem_limit),
    )(x_c, wk_g, wv_g)

    # ---- pass 2: fused Q proj + flash attention + output projection -------
    out = pl.pallas_call(
        functools.partial(_flash_attn_proj_kernel, num_heads=num_heads),
        out_shape=jax.ShapeDtypeStruct((B, N, C), x.dtype),
        grid_spec=pltpu.PrefetchScalarGridSpec(
            num_scalar_prefetch=0,
            grid=(B, N // tq, N // tk),
            in_specs=[
                pl.BlockSpec((1, tq, C), lambda b, i, kv: (b, i, 0)),          # x q-tile
                const_spec((num_heads, C, head_dim), lambda b, i, kv: (0, 0, 0)),  # Wq
                pl.BlockSpec((1, num_heads, tk, head_dim),
                             lambda b, i, kv: (b, 0, kv, 0)),                   # K tile
                pl.BlockSpec((1, num_heads, tk, head_dim),
                             lambda b, i, kv: (b, 0, kv, 0)),                   # V tile
                const_spec((num_heads, head_dim, C), lambda b, i, kv: (0, 0, 0)),  # Wproj
                const_spec((1, C), lambda b, i, kv: (0, 0)),                    # bias
            ],
            out_specs=pl.BlockSpec((1, tq, C), lambda b, i, kv: (b, i, 0)),
            scratch_shapes=[
                pltpu.VMEM((num_heads, tq, head_dim), compute_dtype),  # q (scale folded)
                pltpu.VMEM((num_heads, tq, 1), jnp.float32),           # running max m
                pltpu.VMEM((num_heads, tq, 1), jnp.float32),           # running sum l
                pltpu.VMEM((num_heads, tq, head_dim), jnp.float32),    # acc
            ],
        ),
        compiler_params=pltpu.CompilerParams(
            dimension_semantics=("parallel", "parallel", "arbitrary"),
            vmem_limit_bytes=vmem_limit),
    )(x_c, wq_hcd, k, v, wproj_hdc, bproj)
    return out


def attention_forward(x, params, *, num_heads):
    """x: (B, N, C) float32; params from prepare_attention_params."""
    try:
        return _forward_impl(x, params, num_heads=num_heads,
                             single_buffer_weights=True)
    except Exception:
        # Fallback if pipeline_mode=pl.Buffered(1) is rejected by this Pallas build.
        return _forward_impl(x, params, num_heads=num_heads,
                             single_buffer_weights=False)


def attention_reference(x, w_qkv, w_proj, b_proj, *, num_heads):
    """Plain-JAX float32 reference mirroring the PyTorch module."""
    B, N, C = x.shape
    head_dim = C // num_heads
    scale = head_dim ** (-0.5)

    qkv = x @ w_qkv.T                               # (B, N, 3C)
    qkv = qkv.reshape(B, N, 3, num_heads, head_dim)
    qkv = jnp.transpose(qkv, (2, 0, 3, 1, 4))       # (3, B, H, N, D)
    q, k, v = qkv[0], qkv[1], qkv[2]

    q = q * scale
    attn = jnp.einsum("bhnd,bhmd->bhnm", q, k)
    attn = jax.nn.softmax(attn, axis=-1)
    o = jnp.einsum("bhnm,bhmd->bhnd", attn, v)      # (B, H, N, D)
    o = jnp.transpose(o, (0, 2, 1, 3)).reshape(B, N, C)
    return o @ w_proj.T + b_proj


if __name__ == "__main__":
    B, N, C = 2, 16, 32
    num_heads = 8

    key = jax.random.PRNGKey(0)
    kx, kqkv, kproj, kb = jax.random.split(key, 4)

    x = jax.random.normal(kx, (B, N, C), dtype=jnp.float32)
    # PyTorch Linear weight layout: (out_features, in_features).
    w_qkv = jax.random.normal(kqkv, (3 * C, C), dtype=jnp.float32) * 0.05
    w_proj = jax.random.normal(kproj, (C, C), dtype=jnp.float32) * 0.05
    b_proj = jax.random.normal(kb, (C,), dtype=jnp.float32) * 0.05

    params = prepare_attention_params(w_qkv, w_proj, b_proj, num_heads=num_heads)
    out = attention_forward(x, params, num_heads=num_heads)
    out = jax.block_until_ready(out)

    ref = attention_reference(x, w_qkv, w_proj, b_proj, num_heads=num_heads)
    assert out.shape == (B, N, C)
    max_err = float(jnp.max(jnp.abs(out - ref)))
    # bf16 matmul operands + approx reciprocal => slightly looser tolerance.
    assert max_err < 2e-2, f"mismatch vs reference: max abs err = {max_err}"

    print("KERNEL_OK")
</pallas_src>

<mosaic_0001>
module attributes {stable_mosaic.version = 11 : i64} {
  func.func @_kv_proj_kernel(%arg0: i32, %arg1: i32, %arg2: i32, %arg3: memref<1x16x32xbf16, #tpu.memory_space<vmem>>, %arg4: memref<1x32x32xbf16, #tpu.memory_space<vmem>>, %arg5: memref<1x32x32xbf16, #tpu.memory_space<vmem>>, %arg6: memref<1x8x16x4xbf16, #tpu.memory_space<vmem>>, %arg7: memref<1x8x16x4xbf16, #tpu.memory_space<vmem>>) attributes {dimension_semantics = [#tpu.dimension_semantics<parallel>, #tpu.dimension_semantics<parallel>, #tpu.dimension_semantics<parallel>], iteration_bounds = array<i64: 2, 1, 1>, scalar_prefetch = 0 : i64, scratch_operands = 0 : i64, tpu.core_type = #tpu.core_type<tc>, window_params = [{transform_indices = @transform_0, window_bounds = array<i64: 1, 16, 32>}, {transform_indices = @transform_1, window_bounds = array<i64: 1, 32, 32>}, {transform_indices = @transform_2, window_bounds = array<i64: 1, 32, 32>}, {transform_indices = @transform_3, window_bounds = array<i64: 1, 8, 16, 4>}, {transform_indices = @transform_4, window_bounds = array<i64: 1, 8, 16, 4>}]} {
    %c0 = arith.constant 0 : index
    %c0_0 = arith.constant 0 : index
    %c0_1 = arith.constant 0 : index
    %0 = vector.load %arg3[%c0, %c0_0, %c0_1] : memref<1x16x32xbf16, #tpu.memory_space<vmem>>, vector<1x16x32xbf16>
    %1 = vector.shape_cast %0 : vector<1x16x32xbf16> to vector<16x32xbf16>
    %c0_2 = arith.constant 0 : index
    %c0_3 = arith.constant 0 : index
    %c0_4 = arith.constant 0 : index
    %2 = vector.load %arg4[%c0_2, %c0_3, %c0_4] : memref<1x32x32xbf16, #tpu.memory_space<vmem>>, vector<1x32x32xbf16>
    %3 = vector.shape_cast %2 : vector<1x32x32xbf16> to vector<32x32xbf16>
    %cst = arith.constant dense<0.000000e+00> : vector<16x32xf32>
    %4 = tpu.matmul %1, %3, %cst {dimension_numbers = #tpu.dot_dimension_numbers<[1], [0], [0], [1], [0, 0, 1, 1], [], []>} : vector<16x32xbf16>, vector<32x32xbf16>, vector<16x32xf32> -> vector<16x32xf32>
    %5 = vector.extract_strided_slice %4 {offsets = [0, 0], sizes = [16, 4], strides = [1, 1]} : vector<16x32xf32> to vector<16x4xf32>
    %6 = arith.truncf %5 : vector<16x4xf32> to vector<16x4xbf16>
    %c0_5 = arith.constant 0 : index
    %c0_6 = arith.constant 0 : index
    %c0_7 = arith.constant 0 : index
    %c0_8 = arith.constant 0 : index
    %7 = vector.load %arg6[%c0_5, %c0_6, %c0_7, %c0_8] : memref<1x8x16x4xbf16, #tpu.memory_space<vmem>>, vector<1x1x16x4xbf16>
    %8 = vector.shape_cast %7 : vector<1x1x16x4xbf16> to vector<16x4xbf16>
    %9 = vector.shape_cast %6 : vector<16x4xbf16> to vector<1x1x16x4xbf16>
    tpu.vector_store %arg6[%c0_5, %c0_6, %c0_7, %c0_8], %9 {strides = array<i32>} : memref<1x8x16x4xbf16, #tpu.memory_space<vmem>>, vector<1x1x16x4xbf16>,
    %10 = vector.extract_strided_slice %4 {offsets = [0, 4], sizes = [16, 4], strides = [1, 1]} : vector<16x32xf32> to vector<16x4xf32>
    %11 = arith.truncf %10 : vector<16x4xf32> to vector<16x4xbf16>
    %c0_9 = arith.constant 0 : index
    %c1 = arith.constant 1 : index
    %c0_10 = arith.constant 0 : index
    %c0_11 = arith.constant 0 : index
    %12 = vector.load %arg6[%c0_9, %c1, %c0_10, %c0_11] : memref<1x8x16x4xbf16, #tpu.memory_space<vmem>>, vector<1x1x16x4xbf16>
    %13 = vector.shape_cast %12 : vector<1x1x16x4xbf16> to vector<16x4xbf16>
    %14 = vector.shape_cast %11 : vector<16x4xbf16> to vector<1x1x16x4xbf16>
    tpu.vector_store %arg6[%c0_9, %c1, %c0_10, %c0_11], %14 {strides = array<i32>} : memref<1x8x16x4xbf16, #tpu.memory_space<vmem>>, vector<1x1x16x4xbf16>,
    %15 = vector.extract_strided_slice %4 {offsets = [0, 8], sizes = [16, 4], strides = [1, 1]} : vector<16x32xf32> to vector<16x4xf32>
    %16 = arith.truncf %15 : vector<16x4xf32> to vector<16x4xbf16>
    %c0_12 = arith.constant 0 : index
    %c2 = arith.constant 2 : index
    %c0_13 = arith.constant 0 : index
    %c0_14 = arith.constant 0 : index
    %17 = vector.load %arg6[%c0_12, %c2, %c0_13, %c0_14] : memref<1x8x16x4xbf16, #tpu.memory_space<vmem>>, vector<1x1x16x4xbf16>
    %18 = vector.shape_cast %17 : vector<1x1x16x4xbf16> to vector<16x4xbf16>
    %19 = vector.shape_cast %16 : vector<16x4xbf16> to vector<1x1x16x4xbf16>
    tpu.vector_store %arg6[%c0_12, %c2, %c0_13, %c0_14], %19 {strides = array<i32>} : memref<1x8x16x4xbf16, #tpu.memory_space<vmem>>, vector<1x1x16x4xbf16>,
    %20 = vector.extract_strided_slice %4 {offsets = [0, 12], sizes = [16, 4], strides = [1, 1]} : vector<16x32xf32> to vector<16x4xf32>
    %21 = arith.truncf %20 : vector<16x4xf32> to vector<16x4xbf16>
    %c0_15 = arith.constant 0 : index
    %c3 = arith.constant 3 : index
    %c0_16 = arith.constant 0 : index
    %c0_17 = arith.constant 0 : index
    %22 = vector.load %arg6[%c0_15, %c3, %c0_16, %c0_17] : memref<1x8x16x4xbf16, #tpu.memory_space<vmem>>, vector<1x1x16x4xbf16>
    %23 = vector.shape_cast %22 : vector<1x1x16x4xbf16> to vector<16x4xbf16>
    %24 = vector.shape_cast %21 : vector<16x4xbf16> to vector<1x1x16x4xbf16>
    tpu.vector_store %arg6[%c0_15, %c3, %c0_16, %c0_17], %24 {strides = array<i32>} : memref<1x8x16x4xbf16, #tpu.memory_space<vmem>>, vector<1x1x16x4xbf16>,
    %25 = vector.extract_strided_slice %4 {offsets = [0, 16], sizes = [16, 4], strides = [1, 1]} : vector<16x32xf32> to vector<16x4xf32>
    %26 = arith.truncf %25 : vector<16x4xf32> to vector<16x4xbf16>
    %c0_18 = arith.constant 0 : index
    %c4 = arith.constant 4 : index
    %c0_19 = arith.constant 0 : index
    %c0_20 = arith.constant 0 : index
    %27 = vector.load %arg6[%c0_18, %c4, %c0_19, %c0_20] : memref<1x8x16x4xbf16, #tpu.memory_space<vmem>>, vector<1x1x16x4xbf16>
    %28 = vector.shape_cast %27 : vector<1x1x16x4xbf16> to vector<16x4xbf16>
    %29 = vector.shape_cast %26 : vector<16x4xbf16> to vector<1x1x16x4xbf16>
    tpu.vector_store %arg6[%c0_18, %c4, %c0_19, %c0_20], %29 {strides = array<i32>} : memref<1x8x16x4xbf16, #tpu.memory_space<vmem>>, vector<1x1x16x4xbf16>,
    %30 = vector.extract_strided_slice %4 {offsets = [0, 20], sizes = [16, 4], strides = [1, 1]} : vector<16x32xf32> to vector<16x4xf32>
    %31 = arith.truncf %30 : vector<16x4xf32> to vector<16x4xbf16>
    %c0_21 = arith.constant 0 : index
    %c5 = arith.constant 5 : index
    %c0_22 = arith.constant 0 : index
    %c0_23 = arith.constant 0 : index
    %32 = vector.load %arg6[%c0_21, %c5, %c0_22, %c0_23] : memref<1x8x16x4xbf16, #tpu.memory_space<vmem>>, vector<1x1x16x4xbf16>
    %33 = vector.shape_cast %32 : vector<1x1x16x4xbf16> to vector<16x4xbf16>
    %34 = vector.shape_cast %31 : vector<16x4xbf16> to vector<1x1x16x4xbf16>
    tpu.vector_store %arg6[%c0_21, %c5, %c0_22, %c0_23], %34 {strides = array<i32>} : memref<1x8x16x4xbf16, #tpu.memory_space<vmem>>, vector<1x1x16x4xbf16>,
    %35 = vector.extract_strided_slice %4 {offsets = [0, 24], sizes = [16, 4], strides = [1, 1]} : vector<16x32xf32> to vector<16x4xf32>
    %36 = arith.truncf %35 : vector<16x4xf32> to vector<16x4xbf16>
    %c0_24 = arith.constant 0 : index
    %c6 = arith.constant 6 : index
    %c0_25 = arith.constant 0 : index
    %c0_26 = arith.constant 0 : index
    %37 = vector.load %arg6[%c0_24, %c6, %c0_25, %c0_26] : memref<1x8x16x4xbf16, #tpu.memory_space<vmem>>, vector<1x1x16x4xbf16>
    %38 = vector.shape_cast %37 : vector<1x1x16x4xbf16> to vector<16x4xbf16>
    %39 = vector.shape_cast %36 : vector<16x4xbf16> to vector<1x1x16x4xbf16>
    tpu.vector_store %arg6[%c0_24, %c6, %c0_25, %c0_26], %39 {strides = array<i32>} : memref<1x8x16x4xbf16, #tpu.memory_space<vmem>>, vector<1x1x16x4xbf16>,
    %40 = vector.extract_strided_slice %4 {offsets = [0, 28], sizes = [16, 4], strides = [1, 1]} : vector<16x32xf32> to vector<16x4xf32>
    %41 = arith.truncf %40 : vector<16x4xf32> to vector<16x4xbf16>
    %c0_27 = arith.constant 0 : index
    %c7 = arith.constant 7 : index
    %c0_28 = arith.constant 0 : index
    %c0_29 = arith.constant 0 : index
    %42 = vector.load %arg6[%c0_27, %c7, %c0_28, %c0_29] : memref<1x8x16x4xbf16, #tpu.memory_space<vmem>>, vector<1x1x16x4xbf16>
    %43 = vector.shape_cast %42 : vector<1x1x16x4xbf16> to vector<16x4xbf16>
    %44 = vector.shape_cast %41 : vector<16x4xbf16> to vector<1x1x16x4xbf16>
    tpu.vector_store %arg6[%c0_27, %c7, %c0_28, %c0_29], %44 {strides = array<i32>} : memref<1x8x16x4xbf16, #tpu.memory_space<vmem>>, vector<1x1x16x4xbf16>,
    %c0_30 = arith.constant 0 : index
    %c0_31 = arith.constant 0 : index
    %c0_32 = arith.constant 0 : index
    %45 = vector.load %arg5[%c0_30, %c0_31, %c0_32] : memref<1x32x32xbf16, #tpu.memory_space<vmem>>, vector<1x32x32xbf16>
    %46 = vector.shape_cast %45 : vector<1x32x32xbf16> to vector<32x32xbf16>
    %cst_33 = arith.constant dense<0.000000e+00> : vector<16x32xf32>
    %47 = tpu.matmul %1, %46, %cst_33 {dimension_numbers = #tpu.dot_dimension_numbers<[1], [0], [0], [1], [0, 0, 1, 1], [], []>} : vector<16x32xbf16>, vector<32x32xbf16>, vector<16x32xf32> -> vector<16x32xf32>
    %48 = vector.extract_strided_slice %47 {offsets = [0, 0], sizes = [16, 4], strides = [1, 1]} : vector<16x32xf32> to vector<16x4xf32>
    %49 = arith.truncf %48 : vector<16x4xf32> to vector<16x4xbf16>
    %c0_34 = arith.constant 0 : index
    %c0_35 = arith.constant 0 : index
    %c0_36 = arith.constant 0 : index
    %c0_37 = arith.constant 0 : index
    %50 = vector.load %arg7[%c0_34, %c0_35, %c0_36, %c0_37] : memref<1x8x16x4xbf16, #tpu.memory_space<vmem>>, vector<1x1x16x4xbf16>
    %51 = vector.shape_cast %50 : vector<1x1x16x4xbf16> to vector<16x4xbf16>
    %52 = vector.shape_cast %49 : vector<16x4xbf16> to vector<1x1x16x4xbf16>
    tpu.vector_store %arg7[%c0_34, %c0_35, %c0_36, %c0_37], %52 {strides = array<i32>} : memref<1x8x16x4xbf16, #tpu.memory_space<vmem>>, vector<1x1x16x4xbf16>,
    %53 = vector.extract_strided_slice %47 {offsets = [0, 4], sizes = [16, 4], strides = [1, 1]} : vector<16x32xf32> to vector<16x4xf32>
    %54 = arith.truncf %53 : vector<16x4xf32> to vector<16x4xbf16>
    %c0_38 = arith.constant 0 : index
    %c1_39 = arith.constant 1 : index
    %c0_40 = arith.constant 0 : index
    %c0_41 = arith.constant 0 : index
    %55 = vector.load %arg7[%c0_38, %c1_39, %c0_40, %c0_41] : memref<1x8x16x4xbf16, #tpu.memory_space<vmem>>, vector<1x1x16x4xbf16>
    %56 = vector.shape_cast %55 : vector<1x1x16x4xbf16> to vector<16x4xbf16>
    %57 = vector.shape_cast %54 : vector<16x4xbf16> to vector<1x1x16x4xbf16>
    tpu.vector_store %arg7[%c0_38, %c1_39, %c0_40, %c0_41], %57 {strides = array<i32>} : memref<1x8x16x4xbf16, #tpu.memory_space<vmem>>, vector<1x1x16x4xbf16>,
    %58 = vector.extract_strided_slice %47 {offsets = [0, 8], sizes = [16, 4], strides = [1, 1]} : vector<16x32xf32> to vector<16x4xf32>
    %59 = arith.truncf %58 : vector<16x4xf32> to vector<16x4xbf16>
    %c0_42 = arith.constant 0 : index
    %c2_43 = arith.constant 2 : index
    %c0_44 = arith.constant 0 : index
    %c0_45 = arith.constant 0 : index
    %60 = vector.load %arg7[%c0_42, %c2_43, %c0_44, %c0_45] : memref<1x8x16x4xbf16, #tpu.memory_space<vmem>>, vector<1x1x16x4xbf16>
    %61 = vector.shape_cast %60 : vector<1x1x16x4xbf16> to vector<16x4xbf16>
    %62 = vector.shape_cast %59 : vector<16x4xbf16> to vector<1x1x16x4xbf16>
    tpu.vector_store %arg7[%c0_42, %c2_43, %c0_44, %c0_45], %62 {strides = array<i32>} : memref<1x8x16x4xbf16, #tpu.memory_space<vmem>>, vector<1x1x16x4xbf16>,
    %63 = vector.extract_strided_slice %47 {offsets = [0, 12], sizes = [16, 4], strides = [1, 1]} : vector<16x32xf32> to vector<16x4xf32>
    %64 = arith.truncf %63 : vector<16x4xf32> to vector<16x4xbf16>
    %c0_46 = arith.constant 0 : index
    %c3_47 = arith.constant 3 : index
    %c0_48 = arith.constant 0 : index
    %c0_49 = arith.constant 0 : index
    %65 = vector.load %arg7[%c0_46, %c3_47, %c0_48, %c0_49] : memref<1x8x16x4xbf16, #tpu.memory_space<vmem>>, vector<1x1x16x4xbf16>
    %66 = vector.shape_cast %65 : vector<1x1x16x4xbf16> to vector<16x4xbf16>
    %67 = vector.shape_cast %64 : vector<16x4xbf16> to vector<1x1x16x4xbf16>
    tpu.vector_store %arg7[%c0_46, %c3_47, %c0_48, %c0_49], %67 {strides = array<i32>} : memref<1x8x16x4xbf16, #tpu.memory_space<vmem>>, vector<1x1x16x4xbf16>,
    %68 = vector.extract_strided_slice %47 {offsets = [0, 16], sizes = [16, 4], strides = [1, 1]} : vector<16x32xf32> to vector<16x4xf32>
    %69 = arith.truncf %68 : vector<16x4xf32> to vector<16x4xbf16>
    %c0_50 = arith.constant 0 : index
    %c4_51 = arith.constant 4 : index
    %c0_52 = arith.constant 0 : index
    %c0_53 = arith.constant 0 : index
    %70 = vector.load %arg7[%c0_50, %c4_51, %c0_52, %c0_53] : memref<1x8x16x4xbf16, #tpu.memory_space<vmem>>, vector<1x1x16x4xbf16>
    %71 = vector.shape_cast %70 : vector<1x1x16x4xbf16> to vector<16x4xbf16>
    %72 = vector.shape_cast %69 : vector<16x4xbf16> to vector<1x1x16x4xbf16>
    tpu.vector_store %arg7[%c0_50, %c4_51, %c0_52, %c0_53], %72 {strides = array<i32>} : memref<1x8x16x4xbf16, #tpu.memory_space<vmem>>, vector<1x1x16x4xbf16>,
    %73 = vector.extract_strided_slice %47 {offsets = [0, 20], sizes = [16, 4], strides = [1, 1]} : vector<16x32xf32> to vector<16x4xf32>
    %74 = arith.truncf %73 : vector<16x4xf32> to vector<16x4xbf16>
    %c0_54 = arith.constant 0 : index
    %c5_55 = arith.constant 5 : index
    %c0_56 = arith.constant 0 : index
    %c0_57 = arith.constant 0 : index
    %75 = vector.load %arg7[%c0_54, %c5_55, %c0_56, %c0_57] : memref<1x8x16x4xbf16, #tpu.memory_space<vmem>>, vector<1x1x16x4xbf16>
    %76 = vector.shape_cast %75 : vector<1x1x16x4xbf16> to vector<16x4xbf16>
    %77 = vector.shape_cast %74 : vector<16x4xbf16> to vector<1x1x16x4xbf16>
    tpu.vector_store %arg7[%c0_54, %c5_55, %c0_56, %c0_57], %77 {strides = array<i32>} : memref<1x8x16x4xbf16, #tpu.memory_space<vmem>>, vector<1x1x16x4xbf16>,
    %78 = vector.extract_strided_slice %47 {offsets = [0, 24], sizes = [16, 4], strides = [1, 1]} : vector<16x32xf32> to vector<16x4xf32>
    %79 = arith.truncf %78 : vector<16x4xf32> to vector<16x4xbf16>
    %c0_58 = arith.constant 0 : index
    %c6_59 = arith.constant 6 : index
    %c0_60 = arith.constant 0 : index
    %c0_61 = arith.constant 0 : index
    %80 = vector.load %arg7[%c0_58, %c6_59, %c0_60, %c0_61] : memref<1x8x16x4xbf16, #tpu.memory_space<vmem>>, vector<1x1x16x4xbf16>
    %81 = vector.shape_cast %80 : vector<1x1x16x4xbf16> to vector<16x4xbf16>
    %82 = vector.shape_cast %79 : vector<16x4xbf16> to vector<1x1x16x4xbf16>
    tpu.vector_store %arg7[%c0_58, %c6_59, %c0_60, %c0_61], %82 {strides = array<i32>} : memref<1x8x16x4xbf16, #tpu.memory_space<vmem>>, vector<1x1x16x4xbf16>,
    %83 = vector.extract_strided_slice %47 {offsets = [0, 28], sizes = [16, 4], strides = [1, 1]} : vector<16x32xf32> to vector<16x4xf32>
    %84 = arith.truncf %83 : vector<16x4xf32> to vector<16x4xbf16>
    %c0_62 = arith.constant 0 : index
    %c7_63 = arith.constant 7 : index
    %c0_64 = arith.constant 0 : index
    %c0_65 = arith.constant 0 : index
    %85 = vector.load %arg7[%c0_62, %c7_63, %c0_64, %c0_65] : memref<1x8x16x4xbf16, #tpu.memory_space<vmem>>, vector<1x1x16x4xbf16>
    %86 = vector.shape_cast %85 : vector<1x1x16x4xbf16> to vector<16x4xbf16>
    %87 = vector.shape_cast %84 : vector<16x4xbf16> to vector<1x1x16x4xbf16>
    tpu.vector_store %arg7[%c0_62, %c7_63, %c0_64, %c0_65], %87 {strides = array<i32>} : memref<1x8x16x4xbf16, #tpu.memory_space<vmem>>, vector<1x1x16x4xbf16>,
    return
  }
  func.func @transform_0(%arg0: i32, %arg1: i32, %arg2: i32) -> (i32, i32, i32) {
    %c0_i32 = arith.constant 0 : i32
    %c0_i32_0 = arith.constant 0 : i32
    return %arg0, %arg1, %c0_i32 : i32, i32, i32
  }
  func.func @transform_1(%arg0: i32, %arg1: i32, %arg2: i32) -> (i32, i32, i32) {
    %c0_i32 = arith.constant 0 : i32
    %c0_i32_0 = arith.constant 0 : i32
    %c0_i32_1 = arith.constant 0 : i32
    return %arg2, %c0_i32, %c0_i32_0 : i32, i32, i32
  }
  func.func @transform_2(%arg0: i32, %arg1: i32, %arg2: i32) -> (i32, i32, i32) {
    %c0_i32 = arith.constant 0 : i32
    %c0_i32_0 = arith.constant 0 : i32
    %c0_i32_1 = arith.constant 0 : i32
    return %arg2, %c0_i32, %c0_i32_0 : i32, i32, i32
  }
  func.func @transform_3(%arg0: i32, %arg1: i32, %arg2: i32) -> (i32, i32, i32, i32) {
    %c0_i32 = arith.constant 0 : i32
    %c0_i32_0 = arith.constant 0 : i32
    return %arg0, %arg2, %arg1, %c0_i32 : i32, i32, i32, i32
  }
  func.func @transform_4(%arg0: i32, %arg1: i32, %arg2: i32) -> (i32, i32, i32, i32) {
    %c0_i32 = arith.constant 0 : i32
    %c0_i32_0 = arith.constant 0 : i32
    return %arg0, %arg2, %arg1, %c0_i32 : i32, i32, i32, i32
  }
}

module attributes {stable_mosaic.version = 11 : i64} {
  func.func @_kv_proj_kernel(%arg0: i32, %arg1: i32, %arg2: i32, %arg3: memref<1x16x32xbf16, #tpu.memory_space<vmem>>, %arg4: memref<1x32x32xbf16, #tpu.memory_space<vmem>>, %arg5: memref<1x32x32xbf16, #tpu.memory_space<vmem>>, %arg6: memref<1x8x16x4xbf16, #tpu.memory_space<vmem>>, %arg7: memref<1x8x16x4xbf16, #tpu.memory_space<vmem>>) attributes {dimension_semantics = [#tpu.dimension_semantics<parallel>, #tpu.dimension_semantics<parallel>, #tpu.dimension_semantics<parallel>], iteration_bounds = array<i64: 2, 1, 1>, scalar_prefetch = 0 : i64, scratch_operands = 0 : i64, tpu.core_type = #tpu.core_type<tc>, window_params = [{transform_indices = @transform_0, window_bounds = array<i64: 1, 16, 32>}, {transform_indices = @transform_1, window_bounds = array<i64: 1, 32, 32>}, {transform_indices = @transform_2, window_bounds = array<i64: 1, 32, 32>}, {transform_indices = @transform_3, window_bounds = array<i64: 1, 8, 16, 4>}, {transform_indices = @transform_4, window_bounds = array<i64: 1, 8, 16, 4>}]} {
    %c0 = arith.constant 0 : index
    %c0_0 = arith.constant 0 : index
    %c0_1 = arith.constant 0 : index
    %0 = vector.load %arg3[%c0, %c0_0, %c0_1] : memref<1x16x32xbf16, #tpu.memory_space<vmem>>, vector<1x16x32xbf16>
    %1 = vector.shape_cast %0 : vector<1x16x32xbf16> to vector<16x32xbf16>
    %c0_2 = arith.constant 0 : index
    %c0_3 = arith.constant 0 : index
    %c0_4 = arith.constant 0 : index
    %2 = vector.load %arg4[%c0_2, %c0_3, %c0_4] : memref<1x32x32xbf16, #tpu.memory_space<vmem>>, vector<1x32x32xbf16>
    %3 = vector.shape_cast %2 : vector<1x32x32xbf16> to vector<32x32xbf16>
    %cst = arith.constant dense<0.000000e+00> : vector<16x32xf32>
    %4 = tpu.matmul %1, %3, %cst {dimension_numbers = #tpu.dot_dimension_numbers<[1], [0], [0], [1], [0, 0, 1, 1], [], []>} : vector<16x32xbf16>, vector<32x32xbf16>, vector<16x32xf32> -> vector<16x32xf32>
    %5 = vector.extract_strided_slice %4 {offsets = [0, 0], sizes = [16, 4], strides = [1, 1]} : vector<16x32xf32> to vector<16x4xf32>
    %6 = arith.truncf %5 : vector<16x4xf32> to vector<16x4xbf16>
    %c0_5 = arith.constant 0 : index
    %c0_6 = arith.constant 0 : index
    %c0_7 = arith.constant 0 : index
    %c0_8 = arith.constant 0 : index
    %7 = vector.load %arg6[%c0_5, %c0_6, %c0_7, %c0_8] : memref<1x8x16x4xbf16, #tpu.memory_space<vmem>>, vector<1x1x16x4xbf16>
    %8 = vector.shape_cast %7 : vector<1x1x16x4xbf16> to vector<16x4xbf16>
    %9 = vector.shape_cast %6 : vector<16x4xbf16> to vector<1x1x16x4xbf16>
    tpu.vector_store %arg6[%c0_5, %c0_6, %c0_7, %c0_8], %9 {strides = array<i32>} : memref<1x8x16x4xbf16, #tpu.memory_space<vmem>>, vector<1x1x16x4xbf16>,
    %10 = vector.extract_strided_slice %4 {offsets = [0, 4], sizes = [16, 4], strides = [1, 1]} : vector<16x32xf32> to vector<16x4xf32>
    %11 = arith.truncf %10 : vector<16x4xf32> to vector<16x4xbf16>
    %c0_9 = arith.constant 0 : index
    %c1 = arith.constant 1 : index
    %c0_10 = arith.constant 0 : index
    %c0_11 = arith.constant 0 : index
    %12 = vector.load %arg6[%c0_9, %c1, %c0_10, %c0_11] : memref<1x8x16x4xbf16, #tpu.memory_space<vmem>>, vector<1x1x16x4xbf16>
    %13 = vector.shape_cast %12 : vector<1x1x16x4xbf16> to vector<16x4xbf16>
    %14 = vector.shape_cast %11 : vector<16x4xbf16> to vector<1x1x16x4xbf16>
    tpu.vector_store %arg6[%c0_9, %c1, %c0_10, %c0_11], %14 {strides = array<i32>} : memref<1x8x16x4xbf16, #tpu.memory_space<vmem>>, vector<1x1x16x4xbf16>,
    %15 = vector.extract_strided_slice %4 {offsets = [0, 8], sizes = [16, 4], strides = [1, 1]} : vector<16x32xf32> to vector<16x4xf32>
    %16 = arith.truncf %15 : vector<16x4xf32> to vector<16x4xbf16>
    %c0_12 = arith.constant 0 : index
    %c2 = arith.constant 2 : index
    %c0_13 = arith.constant 0 : index
    %c0_14 = arith.constant 0 : index
    %17 = vector.load %arg6[%c0_12, %c2, %c0_13, %c0_14] : memref<1x8x16x4xbf16, #tpu.memory_space<vmem>>, vector<1x1x16x4xbf16>
    %18 = vector.shape_cast %17 : vector<1x1x16x4xbf16> to vector<16x4xbf16>
    %19 = vector.shape_cast %16 : vector<16x4xbf16> to vector<1x1x16x4xbf16>
    tpu.vector_store %arg6[%c0_12, %c2, %c0_13, %c0_14], %19 {strides = array<i32>} : memref<1x8x16x4xbf16, #tpu.memory_space<vmem>>, vector<1x1x16x4xbf16>,
    %20 = vector.extract_strided_slice %4 {offsets = [0, 12], sizes = [16, 4], strides = [1, 1]} : vector<16x32xf32> to vector<16x4xf32>
    %21 = arith.truncf %20 : vector<16x4xf32> to vector<16x4xbf16>
    %c0_15 = arith.constant 0 : index
    %c3 = arith.constant 3 : index
    %c0_16 = arith.constant 0 : index
    %c0_17 = arith.constant 0 : index
    %22 = vector.load %arg6[%c0_15, %c3, %c0_16, %c0_17] : memref<1x8x16x4xbf16, #tpu.memory_space<vmem>>, vector<1x1x16x4xbf16>
    %23 = vector.shape_cast %22 : vector<1x1x16x4xbf16> to vector<16x4xbf16>
    %24 = vector.shape_cast %21 : vector<16x4xbf16> to vector<1x1x16x4xbf16>
    tpu.vector_store %arg6[%c0_15, %c3, %c0_16, %c0_17], %24 {strides = array<i32>} : memref<1x8x16x4xbf16, #tpu.memory_space<vmem>>, vector<1x1x16x4xbf16>,
    %25 = vector.extract_strided_slice %4 {offsets = [0, 16], sizes = [16, 4], strides = [1, 1]} : vector<16x32xf32> to vector<16x4xf32>
    %26 = arith.truncf %25 : vector<16x4xf32> to vector<16x4xbf16>
    %c0_18 = arith.constant 0 : index
    %c4 = arith.constant 4 : index
    %c0_19 = arith.constant 0 : index
    %c0_20 = arith.constant 0 : index
    %27 = vector.load %arg6[%c0_18, %c4, %c0_19, %c0_20] : memref<1x8x16x4xbf16, #tpu.memory_space<vmem>>, vector<1x1x16x4xbf16>
    %28 = vector.shape_cast %27 : vector<1x1x16x4xbf16> to vector<16x4xbf16>
    %29 = vector.shape_cast %26 : vector<16x4xbf16> to vector<1x1x16x4xbf16>
    tpu.vector_store %arg6[%c0_18, %c4, %c0_19, %c0_20], %29 {strides = array<i32>} : memref<1x8x16x4xbf16, #tpu.memory_space<vmem>>, vector<1x1x16x4xbf16>,
    %30 = vector.extract_strided_slice %4 {offsets = [0, 20], sizes = [16, 4], strides = [1, 1]} : vector<16x32xf32> to vector<16x4xf32>
    %31 = arith.truncf %30 : vector<16x4xf32> to vector<16x4xbf16>
    %c0_21 = arith.constant 0 : index
    %c5 = arith.constant 5 : index
    %c0_22 = arith.constant 0 : index
    %c0_23 = arith.constant 0 : index
    %32 = vector.load %arg6[%c0_21, %c5, %c0_22, %c0_23] : memref<1x8x16x4xbf16, #tpu.memory_space<vmem>>, vector<1x1x16x4xbf16>
    %33 = vector.shape_cast %32 : vector<1x1x16x4xbf16> to vector<16x4xbf16>
    %34 = vector.shape_cast %31 : vector<16x4xbf16> to vector<1x1x16x4xbf16>
    tpu.vector_store %arg6[%c0_21, %c5, %c0_22, %c0_23], %34 {strides = array<i32>} : memref<1x8x16x4xbf16, #tpu.memory_space<vmem>>, vector<1x1x16x4xbf16>,
    %35 = vector.extract_strided_slice %4 {offsets = [0, 24], sizes = [16, 4], strides = [1, 1]} : vector<16x32xf32> to vector<16x4xf32>
    %36 = arith.truncf %35 : vector<16x4xf32> to vector<16x4xbf16>
    %c0_24 = arith.constant 0 : index
    %c6 = arith.constant 6 : index
    %c0_25 = arith.constant 0 : index
    %c0_26 = arith.constant 0 : index
    %37 = vector.load %arg6[%c0_24, %c6, %c0_25, %c0_26] : memref<1x8x16x4xbf16, #tpu.memory_space<vmem>>, vector<1x1x16x4xbf16>
    %38 = vector.shape_cast %37 : vector<1x1x16x4xbf16> to vector<16x4xbf16>
    %39 = vector.shape_cast %36 : vector<16x4xbf16> to vector<1x1x16x4xbf16>
    tpu.vector_store %arg6[%c0_24, %c6, %c0_25, %c0_26], %39 {strides = array<i32>} : memref<1x8x16x4xbf16, #tpu.memory_space<vmem>>, vector<1x1x16x4xbf16>,
    %40 = vector.extract_strided_slice %4 {offsets = [0, 28], sizes = [16, 4], strides = [1, 1]} : vector<16x32xf32> to vector<16x4xf32>
    %41 = arith.truncf %40 : vector<16x4xf32> to vector<16x4xbf16>
    %c0_27 = arith.constant 0 : index
    %c7 = arith.constant 7 : index
    %c0_28 = arith.constant 0 : index
    %c0_29 = arith.constant 0 : index
    %42 = vector.load %arg6[%c0_27, %c7, %c0_28, %c0_29] : memref<1x8x16x4xbf16, #tpu.memory_space<vmem>>, vector<1x1x16x4xbf16>
    %43 = vector.shape_cast %42 : vector<1x1x16x4xbf16> to vector<16x4xbf16>
    %44 = vector.shape_cast %41 : vector<16x4xbf16> to vector<1x1x16x4xbf16>
    tpu.vector_store %arg6[%c0_27, %c7, %c0_28, %c0_29], %44 {strides = array<i32>} : memref<1x8x16x4xbf16, #tpu.memory_space<vmem>>, vector<1x1x16x4xbf16>,
    %c0_30 = arith.constant 0 : index
    %c0_31 = arith.constant 0 : index
    %c0_32 = arith.constant 0 : index
    %45 = vector.load %arg5[%c0_30, %c0_31, %c0_32] : memref<1x32x32xbf16, #tpu.memory_space<vmem>>, vector<1x32x32xbf16>
    %46 = vector.shape_cast %45 : vector<1x32x32xbf16> to vector<32x32xbf16>
    %cst_33 = arith.constant dense<0.000000e+00> : vector<16x32xf32>
    %47 = tpu.matmul %1, %46, %cst_33 {dimension_numbers = #tpu.dot_dimension_numbers<[1], [0], [0], [1], [0, 0, 1, 1], [], []>} : vector<16x32xbf16>, vector<32x32xbf16>, vector<16x32xf32> -> vector<16x32xf32>
    %48 = vector.extract_strided_slice %47 {offsets = [0, 0], sizes = [16, 4], strides = [1, 1]} : vector<16x32xf32> to vector<16x4xf32>
    %49 = arith.truncf %48 : vector<16x4xf32> to vector<16x4xbf16>
    %c0_34 = arith.constant 0 : index
    %c0_35 = arith.constant 0 : index
    %c0_36 = arith.constant 0 : index
    %c0_37 = arith.constant 0 : index
    %50 = vector.load %arg7[%c0_34, %c0_35, %c0_36, %c0_37] : memref<1x8x16x4xbf16, #tpu.memory_space<vmem>>, vector<1x1x16x4xbf16>
    %51 = vector.shape_cast %50 : vector<1x1x16x4xbf16> to vector<16x4xbf16>
    %52 = vector.shape_cast %49 : vector<16x4xbf16> to vector<1x1x16x4xbf16>
    tpu.vector_store %arg7[%c0_34, %c0_35, %c0_36, %c0_37], %52 {strides = array<i32>} : memref<1x8x16x4xbf16, #tpu.memory_space<vmem>>, vector<1x1x16x4xbf16>,
    %53 = vector.extract_strided_slice %47 {offsets = [0, 4], sizes = [16, 4], strides = [1, 1]} : vector<16x32xf32> to vector<16x4xf32>
    %54 = arith.truncf %53 : vector<16x4xf32> to vector<16x4xbf16>
    %c0_38 = arith.constant 0 : index
    %c1_39 = arith.constant 1 : index
    %c0_40 = arith.constant 0 : index
    %c0_41 = arith.constant 0 : index
    %55 = vector.load %arg7[%c0_38, %c1_39, %c0_40, %c0_41] : memref<1x8x16x4xbf16, #tpu.memory_space<vmem>>, vector<1x1x16x4xbf16>
    %56 = vector.shape_cast %55 : vector<1x1x16x4xbf16> to vector<16x4xbf16>
    %57 = vector.shape_cast %54 : vector<16x4xbf16> to vector<1x1x16x4xbf16>
    tpu.vector_store %arg7[%c0_38, %c1_39, %c0_40, %c0_41], %57 {strides = array<i32>} : memref<1x8x16x4xbf16, #tpu.memory_space<vmem>>, vector<1x1x16x4xbf16>,
    %58 = vector.extract_strided_slice %47 {offsets = [0, 8], sizes = [16, 4], strides = [1, 1]} : vector<16x32xf32> to vector<16x4xf32>
    %59 = arith.truncf %58 : vector<16x4xf32> to vector<16x4xbf16>
    %c0_42 = arith.constant 0 : index
    %c2_43 = arith.constant 2 : index
    %c0_44 = arith.constant 0 : index
    %c0_45 = arith.constant 0 : index
    %60 = vector.load %arg7[%c0_42, %c2_43, %c0_44, %c0_45] : memref<1x8x16x4xbf16, #tpu.memory_space<vmem>>, vector<1x1x16x4xbf16>
    %61 = vector.shape_cast %60 : vector<1x1x16x4xbf16> to vector<16x4xbf16>
    %62 = vector.shape_cast %59 : vector<16x4xbf16> to vector<1x1x16x4xbf16>
    tpu.vector_store %arg7[%c0_42, %c2_43, %c0_44, %c0_45], %62 {strides = array<i32>} : memref<1x8x16x4xbf16, #tpu.memory_space<vmem>>, vector<1x1x16x4xbf16>,
    %63 = vector.extract_strided_slice %47 {offsets = [0, 12], sizes = [16, 4], strides = [1, 1]} : vector<16x32xf32> to vector<16x4xf32>
    %64 = arith.truncf %63 : vector<16x4xf32> to vector<16x4xbf16>
    %c0_46 = arith.constant 0 : index
    %c3_47 = arith.constant 3 : index
    %c0_48 = arith.constant 0 : index
    %c0_49 = arith.constant 0 : index
    %65 = vector.load %arg7[%c0_46, %c3_47, %c0_48, %c0_49] : memref<1x8x16x4xbf16, #tpu.memory_space<vmem>>, vector<1x1x16x4xbf16>
    %66 = vector.shape_cast %65 : vector<1x1x16x4xbf16> to vector<16x4xbf16>
    %67 = vector.shape_cast %64 : vector<16x4xbf16> to vector<1x1x16x4xbf16>
    tpu.vector_store %arg7[%c0_46, %c3_47, %c0_48, %c0_49], %67 {strides = array<i32>} : memref<1x8x16x4xbf16, #tpu.memory_space<vmem>>, vector<1x1x16x4xbf16>,
    %68 = vector.extract_strided_slice %47 {offsets = [0, 16], sizes = [16, 4], strides = [1, 1]} : vector<16x32xf32> to vector<16x4xf32>
    %69 = arith.truncf %68 : vector<16x4xf32> to vector<16x4xbf16>
    %c0_50 = arith.constant 0 : index
    %c4_51 = arith.constant 4 : index
    %c0_52 = arith.constant 0 : index
    %c0_53 = arith.constant 0 : index
    %70 = vector.load %arg7[%c0_50, %c4_51, %c0_52, %c0_53] : memref<1x8x16x4xbf16, #tpu.memory_space<vmem>>, vector<1x1x16x4xbf16>
    %71 = vector.shape_cast %70 : vector<1x1x16x4xbf16> to vector<16x4xbf16>
    %72 = vector.shape_cast %69 : vector<16x4xbf16> to vector<1x1x16x4xbf16>
    tpu.vector_store %arg7[%c0_50, %c4_51, %c0_52, %c0_53], %72 {strides = array<i32>} : memref<1x8x16x4xbf16, #tpu.memory_space<vmem>>, vector<1x1x16x4xbf16>,
    %73 = vector.extract_strided_slice %47 {offsets = [0, 20], sizes = [16, 4], strides = [1, 1]} : vector<16x32xf32> to vector<16x4xf32>
    %74 = arith.truncf %73 : vector<16x4xf32> to vector<16x4xbf16>
    %c0_54 = arith.constant 0 : index
    %c5_55 = arith.constant 5 : index
    %c0_56 = arith.constant 0 : index
    %c0_57 = arith.constant 0 : index
    %75 = vector.load %arg7[%c0_54, %c5_55, %c0_56, %c0_57] : memref<1x8x16x4xbf16, #tpu.memory_space<vmem>>, vector<1x1x16x4xbf16>
    %76 = vector.shape_cast %75 : vector<1x1x16x4xbf16> to vector<16x4xbf16>
    %77 = vector.shape_cast %74 : vector<16x4xbf16> to vector<1x1x16x4xbf16>
    tpu.vector_store %arg7[%c0_54, %c5_55, %c0_56, %c0_57], %77 {strides = array<i32>} : memref<1x8x16x4xbf16, #tpu.memory_space<vmem>>, vector<1x1x16x4xbf16>,
    %78 = vector.extract_strided_slice %47 {offsets = [0, 24], sizes = [16, 4], strides = [1, 1]} : vector<16x32xf32> to vector<16x4xf32>
    %79 = arith.truncf %78 : vector<16x4xf32> to vector<16x4xbf16>
    %c0_58 = arith.constant 0 : index
    %c6_59 = arith.constant 6 : index
    %c0_60 = arith.constant 0 : index
    %c0_61 = arith.constant 0 : index
    %80 = vector.load %arg7[%c0_58, %c6_59, %c0_60, %c0_61] : memref<1x8x16x4xbf16, #tpu.memory_space<vmem>>, vector<1x1x16x4xbf16>
    %81 = vector.shape_cast %80 : vector<1x1x16x4xbf16> to vector<16x4xbf16>
    %82 = vector.shape_cast %79 : vector<16x4xbf16> to vector<1x1x16x4xbf16>
    tpu.vector_store %arg7[%c0_58, %c6_59, %c0_60, %c0_61], %82 {strides = array<i32>} : memref<1x8x16x4xbf16, #tpu.memory_space<vmem>>, vector<1x1x16x4xbf16>,
    %83 = vector.extract_strided_slice %47 {offsets = [0, 28], sizes = [16, 4], strides = [1, 1]} : vector<16x32xf32> to vector<16x4xf32>
    %84 = arith.truncf %83 : vector<16x4xf32> to vector<16x4xbf16>
    %c0_62 = arith.constant 0 : index
    %c7_63 = arith.constant 7 : index
    %c0_64 = arith.constant 0 : index
    %c0_65 = arith.constant 0 : index
    %85 = vector.load %arg7[%c0_62, %c7_63, %c0_64, %c0_65] : memref<1x8x16x4xbf16, #tpu.memory_space<vmem>>, vector<1x1x16x4xbf16>
    %86 = vector.shape_cast %85 : vector<1x1x16x4xbf16> to vector<16x4xbf16>
    %87 = vector.shape_cast %84 : vector<16x4xbf16> to vector<1x1x16x4xbf16>
    tpu.vector_store %arg7[%c0_62, %c7_63, %c0_64, %c0_65], %87 {strides = array<i32>} : memref<1x8x16x4xbf16, #tpu.memory_space<vmem>>, vector<1x1x16x4xbf16>,
    return
  }
  func.func @transform_0(%arg0: i32, %arg1: i32, %arg2: i32) -> (i32, i32, i32) {
    %c0_i32 = arith.constant 0 : i32
    %c0_i32_0 = arith.constant 0 : i32
    return %arg0, %arg1, %c0_i32 : i32, i32, i32
  }
  func.func @transform_1(%arg0: i32, %arg1: i32, %arg2: i32) -> (i32, i32, i32) {
    %c0_i32 = arith.constant 0 : i32
    %c0_i32_0 = arith.constant 0 : i32
    %c0_i32_1 = arith.constant 0 : i32
    return %arg2, %c0_i32, %c0_i32_0 : i32, i32, i32
  }
  func.func @transform_2(%arg0: i32, %arg1: i32, %arg2: i32) -> (i32, i32, i32) {
    %c0_i32 = arith.constant 0 : i32
    %c0_i32_0 = arith.constant 0 : i32
    %c0_i32_1 = arith.constant 0 : i32
    return %arg2, %c0_i32, %c0_i32_0 : i32, i32, i32
  }
  func.func @transform_3(%arg0: i32, %arg1: i32, %arg2: i32) -> (i32, i32, i32, i32) {
    %c0_i32 = arith.constant 0 : i32
    %c0_i32_0 = arith.constant 0 : i32
    return %arg0, %arg2, %arg1, %c0_i32 : i32, i32, i32, i32
  }
  func.func @transform_4(%arg0: i32, %arg1: i32, %arg2: i32) -> (i32, i32, i32, i32) {
    %c0_i32 = arith.constant 0 : i32
    %c0_i32_0 = arith.constant 0 : i32
    return %arg0, %arg2, %arg1, %c0_i32 : i32, i32, i32, i32
  }
}

</mosaic_0001>

<llo_original>
// kernel: tpu_custom_call.1
$region0: #{tpu_custom_call.1}
  #allocation0 [shape = 'u32[]', space=smem, size = 0x4, offset = 0x4, fixed_abs, tag = 'smem constant byte address 0x4 - core index']
  #allocation1 [shape = 'u32[144,128]{1,0:T(1,128)}', space=vmem, size = 0x12000, scoped, tag = 'internal scratch']
  %s0 = inlined_call_operand.hbm [shape: bf16[2,16,32], index: 0, kind: input, shape index: {}]
  %s1 = inlined_call_operand.hbm [shape: bf16[1,32,32], index: 1, kind: input, shape index: {}]
  %s2 = inlined_call_operand.hbm [shape: bf16[1,32,32], index: 2, kind: input, shape index: {}]
  %s3 = inlined_call_operand.vmem [shape: bf16[2,8,16,4], index: 3, kind: output, shape index: {0}]
  %s4 = inlined_call_operand.vmem [shape: bf16[2,8,16,4], index: 4, kind: output, shape index: {1}]
  %5 = xla_tuple %s3, %s4
  %s6 = sld [smem:[#allocation0]]
  $region65: #{tpu_custom_call.1} parent=0
    _
  %s8 = ssub.s32 1, %s6
  %s9 = scalar_select 0, %s8, %s6
  $region1: #{tpu_custom_call.1} parent=0
    #allocation2 [shape = 'u8[8192]{0}', space=vmem, size = 0x2000, scoped, tag = 'input window, operand 0']
    #allocation3 [shape = 's32[2]{0}', space=sflag, size = 0x8, scoped, tag = 'scoped memory for tpu_custom_call.1']
    #allocation4 [shape = 'u8[8192]{0}', space=vmem, size = 0x2000, scoped, tag = 'input window, operand 1, single buffered']
    #allocation5 [shape = 's32[1]{0}', space=sflag, size = 0x4, scoped, tag = 'scoped memory for tpu_custom_call.1']
    #allocation6 [shape = 'u8[8192]{0}', space=vmem, size = 0x2000, scoped, tag = 'input window, operand 2, single buffered']
    %10 = vsyncpa [#allocation3], 0
    %s11 = scalar_lea.sflag [#allocation3], 1
    %12 = vsyncpa %s11, 0
    %13 = vsyncpa [#allocation5], 0
    loop: start=0, step=1, limit=4
    $region2: #{tpu_custom_call.1} parent=1 // loop_pre_header
      _
    $region3: #{tpu_custom_call.1} parent=1 // loop_header
      %s15 = sphi 0, %s19
      %p16 = scmp.ge.s32.totalorder %s15, 4
      %s22 = sphi 0, %s41
      %s23 = sphi 0, %s37
      %s24 = sphi 0, %s33
      %s25 = sphi 0, %s22
      %s26 = sphi 0, %s23
      %s27 = sphi 0, %s24
      %s28 = sphi 0, %s25
      %s29 = sphi 0, %s26
      %s30 = sphi 0, %s27
      %s46 = sphi 0, %s48
      %s49 = sphi 0, %s46
      %s50 = sphi 0, %s49
      %s66 = sphi 0, %s50
      %s72 = sphi 0, %s74
      %s75 = sphi 0, %s72
      %s76 = sphi 0, %s75
      %s92 = sphi 0, %s76
      %s98 = sphi 0, %s100
      %s101 = sphi 0, %s98
      %s102 = sphi 0, %s101
      %s118 = sphi 0, %s102
      %s128 = sphi 0, %s130
      %s131 = sphi 0, %s128
      %s132 = sphi 0, %s131
      %s148 = sphi 0, %s132
      %s158 = sphi 0, %s160
      %s161 = sphi 0, %s158
      %s162 = sphi 0, %s161
      %s178 = sphi 0, %s162
    $region4: #{tpu_custom_call.1} parent=1 // loop_header_branch
      %18 = sbr.rel (%p16) target = $region8
    $region5: #{tpu_custom_call.1} parent=1 // loop_body
      %s20 = ssub.s32 %s15, 1
      %s21 = ssub.s32 %s15, 2
      %s31 = sadd.s32 1, %s24
      %p32 = scmp.ge.s32.totalorder %s31, 1
      %s33 = scalar_select %p32, 0, %s31
      %s34 = sadd.s32 1, %s23
      %s35 = scalar_select %p32, %s34, %s23
      %p36 = scmp.ge.s32.totalorder %s35, 1
      %s37 = scalar_select %p36, 0, %s35
      %s38 = sadd.s32 1, %s22
      %s39 = scalar_select %p36, %s38, %s22
      %p40 = scmp.ge.s32.totalorder %s39, 2
      %s41 = scalar_select %p40, 0, %s39
      %s42 = ssub.s32 %s22, %s41
      %s43 = ssub.s32 %s23, %s37
      %s44 = sor.u32 %s42, %s43
      %p45 = scmp.eq.s32.totalorder %s44, 0
      %s47 = sadd.s32 %s46, 1
      %s48 = scalar_select %p45, %s46, %s47
      %p51 = pneg %p45
      %p52 = scmp.eq.s32.totalorder %s15, 1
      %p53 = por %p51, %p52
      %p54 = scmp.ne.s32.totalorder %s46, %s49
      %p55 = scmp.eq.s32.totalorder %s15, 0
      %p56 = por %p54, %p55
      %p57 = scmp.ne.s32.totalorder %s46, %s49
      %p58 = scmp.eq.s32.totalorder %s20, 1
      %p59 = por %p57, %p58
      %p60 = scmp.ne.s32.totalorder %s49, %s50
      %p61 = scmp.eq.s32.totalorder %s20, 0
      %p62 = por %p60, %p61
      %p63 = scmp.ne.s32.totalorder %s49, %s50
      %p64 = scmp.eq.s32.totalorder %s21, 1
      %p65 = por %p63, %p64
      %p67 = scmp.ne.s32.totalorder %s50, %s66
      %p68 = scmp.eq.s32.totalorder %s21, 0
      %p69 = por %p67, %p68
      %s70 = ssub.s32 %s24, %s33
      %p71 = scmp.eq.s32.totalorder %s70, 0
      %s73 = sadd.s32 %s72, 1
      %s74 = scalar_select %p71, %s72, %s73
      %p77 = pneg %p71
      %p78 = scmp.eq.s32.totalorder %s15, 1
      %p79 = por %p77, %p78
      %p80 = scmp.ne.s32.totalorder %s72, %s75
      %p81 = scmp.eq.s32.totalorder %s15, 0
      %p82 = por %p80, %p81
      %p83 = scmp.ne.s32.totalorder %s72, %s75
      %p84 = scmp.eq.s32.totalorder %s20, 1
      %p85 = por %p83, %p84
      %p86 = scmp.ne.s32.totalorder %s75, %s76
      %p87 = scmp.eq.s32.totalorder %s20, 0
      %p88 = por %p86, %p87
      %p89 = scmp.ne.s32.totalorder %s75, %s76
      %p90 = scmp.eq.s32.totalorder %s21, 1
      %p91 = por %p89, %p90
      %p93 = scmp.ne.s32.totalorder %s76, %s92
      %p94 = scmp.eq.s32.totalorder %s21, 0
      %p95 = por %p93, %p94
      %s96 = ssub.s32 %s24, %s33
      %p97 = scmp.eq.s32.totalorder %s96, 0
      %s99 = sadd.s32 %s98, 1
      %s100 = scalar_select %p97, %s98, %s99
      %p103 = pneg %p97
      %p104 = scmp.eq.s32.totalorder %s15, 1
      %p105 = por %p103, %p104
      %p106 = scmp.ne.s32.totalorder %s98, %s101
      %p107 = scmp.eq.s32.totalorder %s15, 0
      %p108 = por %p106, %p107
      %p109 = scmp.ne.s32.totalorder %s98, %s101
      %p110 = scmp.eq.s32.totalorder %s20, 1
      %p111 = por %p109, %p110
      %p112 = scmp.ne.s32.totalorder %s101, %s102
      %p113 = scmp.eq.s32.totalorder %s20, 0
      %p114 = por %p112, %p113
      %p115 = scmp.ne.s32.totalorder %s101, %s102
      %p116 = scmp.eq.s32.totalorder %s21, 1
      %p117 = por %p115, %p116
      %p119 = scmp.ne.s32.totalorder %s102, %s118
      %p120 = scmp.eq.s32.totalorder %s21, 0
      %p121 = por %p119, %p120
      %s122 = ssub.s32 %s22, %s41
      %s123 = ssub.s32 %s24, %s33
      %s124 = sor.u32 %s122, %s123
      %s125 = ssub.s32 %s23, %s37
      %s126 = sor.u32 %s124, %s125
      %p127 = scmp.eq.s32.totalorder %s126, 0
      %s129 = sadd.s32 %s128, 1
      %s130 = scalar_select %p127, %s128, %s129
      %p133 = pneg %p127
      %p134 = scmp.eq.s32.totalorder %s15, 1
      %p135 = por %p133, %p134
      %p136 = scmp.ne.s32.totalorder %s128, %s131
      %p137 = scmp.eq.s32.totalorder %s15, 0
      %p138 = por %p136, %p137
      %p139 = scmp.ne.s32.totalorder %s128, %s131
      %p140 = scmp.eq.s32.totalorder %s20, 1
      %p141 = por %p139, %p140
      %p142 = scmp.ne.s32.totalorder %s131, %s132
      %p143 = scmp.eq.s32.totalorder %s20, 0
      %p144 = por %p142, %p143
      %p145 = scmp.ne.s32.totalorder %s131, %s132
      %p146 = scmp.eq.s32.totalorder %s21, 1
      %p147 = por %p145, %p146
      %p149 = scmp.ne.s32.totalorder %s132, %s148
      %p150 = scmp.eq.s32.totalorder %s21, 0
      %p151 = por %p149, %p150
      %s152 = ssub.s32 %s22, %s41
      %s153 = ssub.s32 %s24, %s33
      %s154 = sor.u32 %s152, %s153
      %s155 = ssub.s32 %s23, %s37
      %s156 = sor.u32 %s154, %s155
      %p157 = scmp.eq.s32.totalorder %s156, 0
      %s159 = sadd.s32 %s158, 1
      %s160 = scalar_select %p157, %s158, %s159
      %p163 = pneg %p157
      %p164 = scmp.eq.s32.totalorder %s15, 1
      %p165 = por %p163, %p164
      %p166 = scmp.ne.s32.totalorder %s158, %s161
      %p167 = scmp.eq.s32.totalorder %s15, 0
      %p168 = por %p166, %p167
      %p169 = scmp.ne.s32.totalorder %s158, %s161
      %p170 = scmp.eq.s32.totalorder %s20, 1
      %p171 = por %p169, %p170
      %p172 = scmp.ne.s32.totalorder %s161, %s162
      %p173 = scmp.eq.s32.totalorder %s20, 0
      %p174 = por %p172, %p173
      %p175 = scmp.ne.s32.totalorder %s161, %s162
      %p176 = scmp.eq.s32.totalorder %s21, 1
      %p177 = por %p175, %p176
      %p179 = scmp.ne.s32.totalorder %s162, %s178
      %p180 = scmp.eq.s32.totalorder %s21, 0
      %p181 = por %p179, %p180
      %p182 = scmp.le.s32.totalorder 1, %s15
      %p183 = scmp.lt.s32.totalorder %s15, 3
      %p184 = pnand %p182, %p183
      %p185 = pneg %p184
      // Predicated region
      $region9: #{tpu_custom_call.1} parent=5 // pred_check
        _
      $region10: #{tpu_custom_call.1} parent=5 // pred_check_branch
        %187 = sbr.rel (%p184) target = $region12
      $region11: #{tpu_custom_call.1} parent=5 // pred_region
        %s188 = ssub.s32 %s15, 1
        // Predicated region
        $region13: #{tpu_custom_call.1} parent=11 // pred_check
          %p189 = pneg %p88
        $region14: #{tpu_custom_call.1} parent=11 // pred_check_branch
          %191 = sbr.rel (%p189) target = $region16
        $region15: #{tpu_custom_call.1} parent=11 // pred_region
          %s193 = ssub.s32 256, 256
          %194 = vsyncadd [#allocation5], %s193
          %s195 = smul.addr %s27, 4
          %s196 = smul.addr %s195, 64
          %s197 = scalar_lea.hbm %s1, %s196
          %s198 = sshll.u32 [#allocation4], 4
          %s199 = int_to_ptr.vmem [resolvable:$true] %s198
          %204 = dma.hbm_to_vmem [thread:$0]  %s197, 256, %s199, [#allocation5], 64, 64, 4
        $region16: #{tpu_custom_call.1} parent=11 // pred_fallthru
          _
        // Predicated region
        $region17: #{tpu_custom_call.1} parent=11 // pred_check
          %p205 = pneg %p114
        $region18: #{tpu_custom_call.1} parent=11 // pred_check_branch
          %207 = sbr.rel (%p205) target = $region20
        $region19: #{tpu_custom_call.1} parent=11 // pred_region
          %s209 = ssub.s32 256, 256
          %210 = vsyncadd [#allocation5], %s209
          %s211 = smul.addr %s27, 4
          %s212 = smul.addr %s211, 64
          %s213 = scalar_lea.hbm %s2, %s212
          %s214 = sshll.u32 [#allocation6], 4
          %s215 = int_to_ptr.vmem [resolvable:$true] %s214
          %220 = dma.hbm_to_vmem [thread:$0]  %s213, 256, %s215, [#allocation5], 64, 64, 4
        $region20: #{tpu_custom_call.1} parent=11 // pred_fallthru
          _
      $region12: #{tpu_custom_call.1} parent=5 // pred_fallthru
        _
      %p221 = scmp.lt.s32.totalorder %s15, 2
      // Predicated region
      $region21: #{tpu_custom_call.1} parent=5 // pred_check
        %p222 = pneg %p221
      $region22: #{tpu_custom_call.1} parent=5 // pred_check_branch
        %224 = sbr.rel (%p222) target = $region24
      $region23: #{tpu_custom_call.1} parent=5 // pred_region
        // Predicated region
        $region25: #{tpu_custom_call.1} parent=23 // pred_check
          %p225 = pneg %p56
        $region26: #{tpu_custom_call.1} parent=23 // pred_check_branch
          %227 = sbr.rel (%p225) target = $region28
        $region27: #{tpu_custom_call.1} parent=23 // pred_region
          %s228 = sand.u32 %s46, 1
          %s229 = scalar_lea.sflag [#allocation3], %s228
          %s230 = sand.u32 %s46, 1
          %s231 = smul.addr %s230, 8
          %s232 = scalar_lea.vmem [#allocation2], %s231
          %s233 = smul.u32 2, %s23
          %s235 = ssub.s32 128, 128
          %236 = vsyncadd %s229, %s235
          %s237 = smul.addr %s22, 2
          %s238 = sadd.s32 %s233, %s237
          %s239 = smul.addr %s238, 64
          %s240 = scalar_lea.hbm %s0, %s239
          %s241 = sshll.u32 %s232, 4
          %s242 = int_to_ptr.vmem [resolvable:$true] %s241
          %247 = dma.hbm_to_vmem [thread:$0]  %s240, 128, %s242, %s229, 64, 64, 4
        $region28: #{tpu_custom_call.1} parent=23 // pred_fallthru
          _
      $region24: #{tpu_custom_call.1} parent=5 // pred_fallthru
        _
      %p248 = scmp.le.s32.totalorder 1, %s15
      %p249 = scmp.lt.s32.totalorder %s15, 3
      %p250 = pnand %p248, %p249
      %p251 = pneg %p250
      // Predicated region
      $region29: #{tpu_custom_call.1} parent=5 // pred_check
        _
      $region30: #{tpu_custom_call.1} parent=5 // pred_check_branch
        %253 = sbr.rel (%p250) target = $region32
      $region31: #{tpu_custom_call.1} parent=5 // pred_region
        %s254 = ssub.s32 %s15, 1
        %s255 = sand.u32 %s49, 1
        %s256 = scalar_lea.sflag [#allocation3], %s255
        %s257 = sand.u32 %s49, 1
        %s258 = smul.addr %s257, 8
        %s259 = scalar_lea.vmem [#allocation2], %s258
        // Predicated region
        $region33: #{tpu_custom_call.1} parent=31 // pred_check
          %p260 = pneg %p62
        $region34: #{tpu_custom_call.1} parent=31 // pred_check_branch
          %262 = sbr.rel (%p260) target = $region36
        $region35: #{tpu_custom_call.1} parent=31 // pred_region
          %263 = dma.done %s256, 128
        $region36: #{tpu_custom_call.1} parent=31 // pred_fallthru
          _
        // Predicated region
        $region37: #{tpu_custom_call.1} parent=31 // pred_check
          %p264 = pneg %p88
        $region38: #{tpu_custom_call.1} parent=31 // pred_check_branch
          %266 = sbr.rel (%p264) target = $region40
        $region39: #{tpu_custom_call.1} parent=31 // pred_region
          %267 = dma.done [#allocation5], 256
        $region40: #{tpu_custom_call.1} parent=31 // pred_fallthru
          _
        // Predicated region
        $region41: #{tpu_custom_call.1} parent=31 // pred_check
          %p268 = pneg %p114
        $region42: #{tpu_custom_call.1} parent=31 // pred_check_branch
          %270 = sbr.rel (%p268) target = $region44
        $region43: #{tpu_custom_call.1} parent=31 // pred_region
          %271 = dma.done [#allocation5], 256
        $region44: #{tpu_custom_call.1} parent=31 // pred_fallthru
          _
        %s272 = sand.u32 %s49, 1
        %s273 = scalar_lea.sflag [#allocation3], %s272
        %s274 = sand.u32 %s49, 1
        %s275 = smul.addr %s274, 8
        %s276 = scalar_lea.vmem [#allocation2], %s275
        %p277 = pneg %p62
        %p278 = pneg %p59
        %p279 = pneg %p88
        %p280 = pneg %p85
        %p281 = pneg %p114
        %p282 = pneg %p111
        %p283 = pneg %p144
        %p284 = pneg %p141
        %s285 = smul.u32 8, %s27
        %s286 = smul.u32 2, %s26
        %p287 = scmp.lt.s32.totalorder %s25, 1
        %s288 = scalar_select %p287, %s25, 1
        %p289 = scmp.lt.s32.totalorder %s285, 7
        %s290 = scalar_select %p289, %s285, 7
        %p291 = scmp.lt.s32.totalorder %s286, 1
        %s292 = scalar_select %p291, %s286, 1
        %s293 = smul.addr %s290, 2
        %s294 = sadd.s32 %s292, %s293
        %s295 = smul.addr %s288, 16
        %s296 = sadd.s32 %s294, %s295
        %s297 = smul.addr %s296, 4
        %s298 = scalar_lea.vmem %s3, %s297
        %p299 = pneg %p174
        %p300 = pneg %p171
        %s301 = smul.u32 8, %s27
        %s302 = smul.u32 2, %s26
        %p303 = scmp.lt.s32.totalorder %s25, 1
        %s304 = scalar_select %p303, %s25, 1
        %p305 = scmp.lt.s32.totalorder %s301, 7
        %s306 = scalar_select %p305, %s301, 7
        %p307 = scmp.lt.s32.totalorder %s302, 1
        %s308 = scalar_select %p307, %s302, 1
        %s309 = smul.addr %s306, 2
        %s310 = sadd.s32 %s308, %s309
        %s311 = smul.addr %s304, 16
        %s312 = sadd.s32 %s310, %s311
        %s313 = smul.addr %s312, 4
        %s314 = scalar_lea.vmem %s4, %s313
        %s315 = smul.u32 2, %s26
        %s316 = smul.u32 8, %s27
        %s317 = smul.u32 2, %s26
        %p318 = scmp.lt.s32.totalorder %s25, 1
        %s319 = scalar_select %p318, %s25, 1
        %p320 = scmp.lt.s32.totalorder %s316, 7
        %s321 = scalar_select %p320, %s316, 7
        %p322 = scmp.lt.s32.totalorder %s317, 1
        %s323 = scalar_select %p322, %s317, 1
        %s324 = smul.addr %s321, 2
        %s325 = sadd.s32 %s323, %s324
        %s326 = smul.addr %s319, 16
        %s327 = sadd.s32 %s325, %s326
        %s328 = smul.addr %s327, 4
        %s329 = scalar_lea.vmem %s3, %s328
        %s330 = smul.u32 8, %s27
        %s331 = smul.u32 2, %s26
        %s332 = smul.u32 8, %s27
        %s333 = smul.u32 2, %s26
        %p334 = scmp.lt.s32.totalorder %s25, 1
        %s335 = scalar_select %p334, %s25, 1
        %p336 = scmp.lt.s32.totalorder %s332, 7
        %s337 = scalar_select %p336, %s332, 7
        %p338 = scmp.lt.s32.totalorder %s333, 1
        %s339 = scalar_select %p338, %s333, 1
        %s340 = smul.addr %s337, 2
        %s341 = sadd.s32 %s339, %s340
        %s342 = smul.addr %s335, 16
        %s343 = sadd.s32 %s341, %s342
        %s344 = smul.addr %s343, 4
        %s345 = scalar_lea.vmem %s4, %s344
        %s346 = smul.u32 8, %s27
        %s347 = smul.u32 2, %s26
        %v349 = vld [vmem:[%s259] sm:$0xf]
        %v350 = vld [vmem:[%s259 + $0x4] sm:$0xf]
        %v351 = vld [vmem:[#allocation4] sm:$0xf]
        %v352 = vld [vmem:[#allocation4 + $0x4] sm:$0xf]
        %v353 = vld [vmem:[#allocation4 + $0x8] sm:$0xf]
        %v354 = vld [vmem:[#allocation4 + $0xc] sm:$0xf]
        %v357 = vunpack.c.l.b16 %v349
        %v358 = vunpack.c.l.b16 %v350
        %v359 = vpack.c.b16 %v358, %v357
        %v364 = vunpack.c.l.b16 %v351
        %v365 = vunpack.c.l.b16 %v352
        %v366 = vunpack.c.l.b16 %v353
        %v367 = vunpack.c.l.b16 %v354
        %v368 = vpack.c.b16 %v365, %v364
        %v369 = vpack.c.b16 %v367, %v366
        %vm372 = vcmask 261120
        %v374 = vsel %vm372, %v359, 0
        %376 = vmatprep.subr.bf16.mxu0 0
        %377 = vmatpush1.bf16.msra.mxu0 0
        %378 = vmatprep.subr.bf16.mxu0 0
        %379 = vmatpush1.bf16.msra.mxu0 0
        %380 = vmatprep.subr.bf16.mxu0 0
        %381 = vmatpush1.bf16.msra.mxu0 0
        %382 = vmatprep.subr.bf16.mxu0 0
        %383 = vmatpush1.bf16.msra.mxu0 0
        %384 = vmatprep.subr.bf16.mxu0 0
        %385 = vmatpush1.bf16.msra.mxu0 0
        %386 = vmatprep.subr.bf16.mxu0 0
        %387 = vmatpush1.bf16.msra.mxu0 0
        %388 = vmatprep.subr.bf16.mxu0 0
        %389 = vmatpush1.bf16.msra.mxu0 %v369
        %390 = vmatprep.subr.bf16.mxu0 0
        %391 = vmatpush1.bf16.msra.mxu0 %v368
        %392 = vmatprep.subr.bf16.mxu0 0
        %393 = vmatpush2.bf16.msra.mxu0 0
        %394 = vmatprep.subr.bf16.mxu0 0
        %395 = vmatpush2.bf16.msra.mxu0 0
        %396 = vmatprep.subr.bf16.mxu0 0
        %397 = vmatpush2.bf16.msra.mxu0 0
        %398 = vmatprep.subr.bf16.mxu0 0
        %399 = vmatpush2.bf16.msra.mxu0 0
        %400 = vmatprep.subr.bf16.mxu0 0
        %401 = vmatpush2.bf16.msra.mxu0 0
        %402 = vmatprep.subr.bf16.mxu0 0
        %403 = vmatpush2.bf16.msra.mxu0 0
        %404 = vmatprep.subr.bf16.mxu0 0
        %405 = vmatpush2.bf16.msra.mxu0 0
        %406 = vmatprep.subr.bf16.mxu0 0
        %407 = vmatpush2.bf16.msra.mxu0 0
        %408 = vmatprep.mubr.bf16.mxu0 0
        %409 = vmatmul.mubr.bf16.gmra.mxu0 %v374
        %v410 = vpop.f32.mrf.mxu0
        %v411 = vadd.f32 0.0, %v410
        %v412 = vpop.f32.mrf.mxu0
        %v413 = vpop.f32.mrf.mxu0
        %v414 = vadd.f32 0.0, %v413
        %v415 = vpop.f32.mrf.mxu0
        %416 = vdwg.mxu0
        %v417 = vpack.c.bf16 %v414, %v411
        %v419 = vunpack.c.l.b16 %v417
        %v420 = vunpack.c.h.b16 %v417
        %v421 = vpack.c.b16 %v419, %v419
        %v422 = vpack.c.b16 %v420, %v420
        %vm425 = vcmask 27648
        %426 = vst.msk [vmem:[%s329] sm:$0xf] %vm425, %v421
        %427 = vst.msk [vmem:[%s329 + $0x4] sm:$0xf] %vm425, %v422
        %428 = vrot.lane.b32.xlu0 %v421, 124
        %v429 = vpop.permute.xlu0 %428
        %430 = vrot.lane.b32.xlu0 %v422, 124
        %v431 = vpop.permute.xlu0 %430
        %s434 = scalar_lea.vmem %s329, 8
        %435 = vst.msk [vmem:[%s434] sm:$0xf] %vm425, %v429
        %436 = vst.msk [vmem:[%s434 + $0x4] sm:$0xf] %vm425, %v431
        %437 = vrot.lane.b32.xlu0 %v421, 120
        %v438 = vpop.permute.xlu0 %437
        %439 = vrot.lane.b32.xlu0 %v422, 120
        %v440 = vpop.permute.xlu0 %439
        %s443 = scalar_lea.vmem %s329, 16
        %444 = vst.msk [vmem:[%s443] sm:$0xf] %vm425, %v438
        %445 = vst.msk [vmem:[%s443 + $0x4] sm:$0xf] %vm425, %v440
        %446 = vrot.lane.b32.xlu0 %v421, 116
        %v447 = vpop.permute.xlu0 %446
        %448 = vrot.lane.b32.xlu0 %v422, 116
        %v449 = vpop.permute.xlu0 %448
        %s452 = scalar_lea.vmem %s329, 24
        %453 = vst.msk [vmem:[%s452] sm:$0xf] %vm425, %v447
        %454 = vst.msk [vmem:[%s452 + $0x4] sm:$0xf] %vm425, %v449
        %455 = vrot.lane.b32.xlu0 %v421, 112
        %v456 = vpop.permute.xlu0 %455
        %457 = vrot.lane.b32.xlu0 %v422, 112
        %v458 = vpop.permute.xlu0 %457
        %s461 = scalar_lea.vmem %s329, 32
        %462 = vst.msk [vmem:[%s461] sm:$0xf] %vm425, %v456
        %463 = vst.msk [vmem:[%s461 + $0x4] sm:$0xf] %vm425, %v458
        %464 = vrot.lane.b32.xlu0 %v421, 108
        %v465 = vpop.permute.xlu0 %464
        %466 = vrot.lane.b32.xlu0 %v422, 108
        %v467 = vpop.permute.xlu0 %466
        %s470 = scalar_lea.vmem %s329, 40
        %471 = vst.msk [vmem:[%s470] sm:$0xf] %vm425, %v465
        %472 = vst.msk [vmem:[%s470 + $0x4] sm:$0xf] %vm425, %v467
        %473 = vrot.lane.b32.xlu0 %v421, 104
        %v474 = vpop.permute.xlu0 %473
        %475 = vrot.lane.b32.xlu0 %v422, 104
        %v476 = vpop.permute.xlu0 %475
        %s479 = scalar_lea.vmem %s329, 48
        %480 = vst.msk [vmem:[%s479] sm:$0xf] %vm425, %v474
        %481 = vst.msk [vmem:[%s479 + $0x4] sm:$0xf] %vm425, %v476
        %482 = vrot.lane.b32.xlu0 %v421, 100
        %v483 = vpop.permute.xlu0 %482
        %484 = vrot.lane.b32.xlu0 %v422, 100
        %v485 = vpop.permute.xlu0 %484
        %s488 = scalar_lea.vmem %s329, 56
        %489 = vst.msk [vmem:[%s488] sm:$0xf] %vm425, %v483
        %490 = vst.msk [vmem:[%s488 + $0x4] sm:$0xf] %vm425, %v485
        %v491 = vld [vmem:[#allocation6] sm:$0xf]
        %v492 = vld [vmem:[#allocation6 + $0x4] sm:$0xf]
        %v493 = vld [vmem:[#allocation6 + $0x8] sm:$0xf]
        %v494 = vld [vmem:[#allocation6 + $0xc] sm:$0xf]
        %v499 = vunpack.c.l.b16 %v491
        %v500 = vunpack.c.l.b16 %v492
        %v501 = vunpack.c.l.b16 %v493
        %v502 = vunpack.c.l.b16 %v494
        %v503 = vpack.c.b16 %v500, %v499
        %v504 = vpack.c.b16 %v502, %v501
        %507 = vmatprep.subr.bf16.mxu0 0
        %508 = vmatpush1.bf16.msra.mxu0 0
        %509 = vmatprep.subr.bf16.mxu0 0
        %510 = vmatpush1.bf16.msra.mxu0 0
        %511 = vmatprep.subr.bf16.mxu0 0
        %512 = vmatpush1.bf16.msra.mxu0 0
        %513 = vmatprep.subr.bf16.mxu0 0
        %514 = vmatpush1.bf16.msra.mxu0 0
        %515 = vmatprep.subr.bf16.mxu0 0
        %516 = vmatpush1.bf16.msra.mxu0 0
        %517 = vmatprep.subr.bf16.mxu0 0
        %518 = vmatpush1.bf16.msra.mxu0 0
        %519 = vmatprep.subr.bf16.mxu0 0
        %520 = vmatpush1.bf16.msra.mxu0 %v504
        %521 = vmatprep.subr.bf16.mxu0 0
        %522 = vmatpush1.bf16.msra.mxu0 %v503
        %523 = vmatprep.subr.bf16.mxu0 0
        %524 = vmatpush2.bf16.msra.mxu0 0
        %525 = vmatprep.subr.bf16.mxu0 0
        %526 = vmatpush2.bf16.msra.mxu0 0
        %527 = vmatprep.subr.bf16.mxu0 0
        %528 = vmatpush2.bf16.msra.mxu0 0
        %529 = vmatprep.subr.bf16.mxu0 0
        %530 = vmatpush2.bf16.msra.mxu0 0
        %531 = vmatprep.subr.bf16.mxu0 0
        %532 = vmatpush2.bf16.msra.mxu0 0
        %533 = vmatprep.subr.bf16.mxu0 0
        %534 = vmatpush2.bf16.msra.mxu0 0
        %535 = vmatprep.subr.bf16.mxu0 0
        %536 = vmatpush2.bf16.msra.mxu0 0
        %537 = vmatprep.subr.bf16.mxu0 0
        %538 = vmatpush2.bf16.msra.mxu0 0
        %539 = vmatprep.mubr.bf16.mxu0 0
        %540 = vmatmul.mubr.bf16.gmra.mxu0 %v374
        %v541 = vpop.f32.mrf.mxu0
        %v542 = vadd.f32 0.0, %v541
        %v543 = vpop.f32.mrf.mxu0
        %v544 = vpop.f32.mrf.mxu0
        %v545 = vadd.f32 0.0, %v544
        %v546 = vpop.f32.mrf.mxu0
        %547 = vdwg.mxu0
        %v548 = vpack.c.bf16 %v545, %v542
        %v550 = vunpack.c.l.b16 %v548
        %v551 = vunpack.c.h.b16 %v548
        %v552 = vpack.c.b16 %v550, %v550
        %v553 = vpack.c.b16 %v551, %v551
        %556 = vst.msk [vmem:[%s345] sm:$0xf] %vm425, %v552
        %557 = vst.msk [vmem:[%s345 + $0x4] sm:$0xf] %vm425, %v553
        %558 = vrot.lane.b32.xlu0 %v552, 124
        %v559 = vpop.permute.xlu0 %558
        %560 = vrot.lane.b32.xlu0 %v553, 124
        %v561 = vpop.permute.xlu0 %560
        %s564 = scalar_lea.vmem %s345, 8
        %565 = vst.msk [vmem:[%s564] sm:$0xf] %vm425, %v559
        %566 = vst.msk [vmem:[%s564 + $0x4] sm:$0xf] %vm425, %v561
        %567 = vrot.lane.b32.xlu0 %v552, 120
        %v568 = vpop.permute.xlu0 %567
        %569 = vrot.lane.b32.xlu0 %v553, 120
        %v570 = vpop.permute.xlu0 %569
        %s573 = scalar_lea.vmem %s345, 16
        %574 = vst.msk [vmem:[%s573] sm:$0xf] %vm425, %v568
        %575 = vst.msk [vmem:[%s573 + $0x4] sm:$0xf] %vm425, %v570
        %576 = vrot.lane.b32.xlu0 %v552, 116
        %v577 = vpop.permute.xlu0 %576
        %578 = vrot.lane.b32.xlu0 %v553, 116
        %v579 = vpop.permute.xlu0 %578
        %s582 = scalar_lea.vmem %s345, 24
        %583 = vst.msk [vmem:[%s582] sm:$0xf] %vm425, %v577
        %584 = vst.msk [vmem:[%s582 + $0x4] sm:$0xf] %vm425, %v579
        %585 = vrot.lane.b32.xlu0 %v552, 112
        %v586 = vpop.permute.xlu0 %585
        %587 = vrot.lane.b32.xlu0 %v553, 112
        %v588 = vpop.permute.xlu0 %587
        %s591 = scalar_lea.vmem %s345, 32
        %592 = vst.msk [vmem:[%s591] sm:$0xf] %vm425, %v586
        %593 = vst.msk [vmem:[%s591 + $0x4] sm:$0xf] %vm425, %v588
        %594 = vrot.lane.b32.xlu0 %v552, 108
        %v595 = vpop.permute.xlu0 %594
        %596 = vrot.lane.b32.xlu0 %v553, 108
        %v597 = vpop.permute.xlu0 %596
        %s600 = scalar_lea.vmem %s345, 40
        %601 = vst.msk [vmem:[%s600] sm:$0xf] %vm425, %v595
        %602 = vst.msk [vmem:[%s600 + $0x4] sm:$0xf] %vm425, %v597
        %603 = vrot.lane.b32.xlu0 %v552, 104
        %v604 = vpop.permute.xlu0 %603
        %605 = vrot.lane.b32.xlu0 %v553, 104
        %v606 = vpop.permute.xlu0 %605
        %s609 = scalar_lea.vmem %s345, 48
        %610 = vst.msk [vmem:[%s609] sm:$0xf] %vm425, %v604
        %611 = vst.msk [vmem:[%s609 + $0x4] sm:$0xf] %vm425, %v606
        %612 = vrot.lane.b32.xlu0 %v552, 100
        %v613 = vpop.permute.xlu0 %612
        %614 = vrot.lane.b32.xlu0 %v553, 100
        %v615 = vpop.permute.xlu0 %614
        %s618 = scalar_lea.vmem %s345, 56
        %619 = vst.msk [vmem:[%s618] sm:$0xf] %vm425, %v613
        %620 = vst.msk [vmem:[%s618 + $0x4] sm:$0xf] %vm425, %v615
        %s621 = smul.u32 8, %s27
        %s622 = smul.u32 2, %s26
        %p623 = scmp.lt.s32.totalorder %s25, 1
        %s624 = scalar_select %p623, %s25, 1
        %p625 = scmp.lt.s32.totalorder %s621, 7
        %s626 = scalar_select %p625, %s621, 7
        %p627 = scmp.lt.s32.totalorder %s622, 1
        %s628 = scalar_select %p627, %s622, 1
        %s629 = smul.addr %s626, 2
        %s630 = sadd.s32 %s628, %s629
        %s631 = smul.addr %s624, 16
        %s632 = sadd.s32 %s630, %s631
        %s633 = smul.addr %s632, 4
        %s634 = scalar_lea.vmem %s3, %s633
        %s635 = smul.u32 8, %s27
        %s636 = smul.u32 2, %s26
        %p637 = scmp.lt.s32.totalorder %s25, 1
        %s638 = scalar_select %p637, %s25, 1
        %p639 = scmp.lt.s32.totalorder %s635, 7
        %s640 = scalar_select %p639, %s635, 7
        %p641 = scmp.lt.s32.totalorder %s636, 1
        %s642 = scalar_select %p641, %s636, 1
        %s643 = smul.addr %s640, 2
        %s644 = sadd.s32 %s642, %s643
        %s645 = smul.addr %s638, 16
        %s646 = sadd.s32 %s644, %s645
        %s647 = smul.addr %s646, 4
        %s648 = scalar_lea.vmem %s4, %s647
        // Predicated region
        $region45: #{tpu_custom_call.1} parent=31 // pred_check
          %p649 = pneg %p141
        $region46: #{tpu_custom_call.1} parent=31 // pred_check_branch
          %651 = sbr.rel (%p649) target = $region48
        $region47: #{tpu_custom_call.1} parent=31 // pred_region
          %s652 = smul.u32 8, %s27
          %s653 = smul.u32 2, %s26
        $region48: #{tpu_custom_call.1} parent=31 // pred_fallthru
          _
        // Predicated region
        $region49: #{tpu_custom_call.1} parent=31 // pred_check
          %p654 = pneg %p171
        $region50: #{tpu_custom_call.1} parent=31 // pred_check_branch
          %656 = sbr.rel (%p654) target = $region52
        $region51: #{tpu_custom_call.1} parent=31 // pred_region
          %s657 = smul.u32 8, %s27
          %s658 = smul.u32 2, %s26
        $region52: #{tpu_custom_call.1} parent=31 // pred_fallthru
          _
      $region32: #{tpu_custom_call.1} parent=5 // pred_fallthru
        _
      %p659 = scmp.le.s32.totalorder 2, %s15
      // Predicated region
      $region53: #{tpu_custom_call.1} parent=5 // pred_check
        %p660 = pneg %p659
      $region54: #{tpu_custom_call.1} parent=5 // pred_check_branch
        %662 = sbr.rel (%p660) target = $region56
      $region55: #{tpu_custom_call.1} parent=5 // pred_region
        %s663 = ssub.s32 %s15, 2
        // Predicated region
        $region57: #{tpu_custom_call.1} parent=55 // pred_check
          %p664 = pneg %p147
        $region58: #{tpu_custom_call.1} parent=55 // pred_check_branch
          %666 = sbr.rel (%p664) target = $region60
        $region59: #{tpu_custom_call.1} parent=55 // pred_region
          %s667 = smul.u32 8, %s30
          %s668 = smul.u32 2, %s29
          %p669 = scmp.lt.s32.totalorder %s28, 1
          %s670 = scalar_select %p669, %s28, 1
          %p671 = scmp.lt.s32.totalorder %s667, 7
          %s672 = scalar_select %p671, %s667, 7
          %p673 = scmp.lt.s32.totalorder %s668, 1
          %s674 = scalar_select %p673, %s668, 1
          %s675 = smul.addr %s672, 2
          %s676 = sadd.s32 %s674, %s675
          %s677 = smul.addr %s670, 16
          %s678 = sadd.s32 %s676, %s677
          %s679 = smul.addr %s678, 4
          %s680 = scalar_lea.vmem %s3, %s679
        $region60: #{tpu_custom_call.1} parent=55 // pred_fallthru
          _
        // Predicated region
        $region61: #{tpu_custom_call.1} parent=55 // pred_check
          %p681 = pneg %p177
        $region62: #{tpu_custom_call.1} parent=55 // pred_check_branch
          %683 = sbr.rel (%p681) target = $region64
        $region63: #{tpu_custom_call.1} parent=55 // pred_region
          %s684 = smul.u32 8, %s30
          %s685 = smul.u32 2, %s29
          %p686 = scmp.lt.s32.totalorder %s28, 1
          %s687 = scalar_select %p686, %s28, 1
          %p688 = scmp.lt.s32.totalorder %s684, 7
          %s689 = scalar_select %p688, %s684, 7
          %p690 = scmp.lt.s32.totalorder %s685, 1
          %s691 = scalar_select %p690, %s685, 1
          %s692 = smul.addr %s689, 2
          %s693 = sadd.s32 %s691, %s692
          %s694 = smul.addr %s687, 16
          %s695 = sadd.s32 %s693, %s694
          %s696 = smul.addr %s695, 4
          %s697 = scalar_lea.vmem %s4, %s696
        $region64: #{tpu_custom_call.1} parent=55 // pred_fallthru
          _
      $region56: #{tpu_custom_call.1} parent=5 // pred_fallthru
        _
    $region6: #{tpu_custom_call.1} parent=1 // loop_footer
      %s19 = sadd.s32 1, %s15
    $region7: #{tpu_custom_call.1} parent=1 // loop_footer_branch
      %14 = sbr.rel target = $region3
    $region8: #{tpu_custom_call.1} parent=1 // loop_exit
      _
    %698 = vsyncpa [#allocation3], 1
    %s699 = scalar_lea.sflag [#allocation3], 1
    %700 = vsyncpa %s699, 1
    %701 = vsyncpa [#allocation5], 1

// kernel: tpu_custom_call.1
$region0: #{tpu_custom_call.1}
  #allocation0 [shape = 'u32[]', space=smem, size = 0x4, offset = 0x4, fixed_abs, tag = 'smem constant byte address 0x4 - core index']
  #allocation1 [shape = 'u32[144,128]{1,0:T(1,128)}', space=vmem, size = 0x12000, scoped, tag = 'internal scratch']
  %s0 = inlined_call_operand.hbm [shape: bf16[2,16,32], index: 0, kind: input, shape index: {}]
  %s1 = inlined_call_operand.hbm [shape: bf16[1,32,32], index: 1, kind: input, shape index: {}]
  %s2 = inlined_call_operand.hbm [shape: bf16[1,32,32], index: 2, kind: input, shape index: {}]
  %s3 = inlined_call_operand.vmem [shape: bf16[2,8,16,4], index: 3, kind: output, shape index: {0}]
  %s4 = inlined_call_operand.vmem [shape: bf16[2,8,16,4], index: 4, kind: output, shape index: {1}]
  %5 = xla_tuple %s3, %s4
  %s6 = sld [smem:[#allocation0]]
  $region65: #{tpu_custom_call.1} parent=0
    _
  %s8 = ssub.s32 1, %s6
  %s9 = scalar_select 0, %s8, %s6
  $region1: #{tpu_custom_call.1} parent=0
    #allocation2 [shape = 'u8[8192]{0}', space=vmem, size = 0x2000, scoped, tag = 'input window, operand 0']
    #allocation3 [shape = 's32[2]{0}', space=sflag, size = 0x8, scoped, tag = 'scoped memory for tpu_custom_call.1']
    #allocation4 [shape = 'u8[8192]{0}', space=vmem, size = 0x2000, scoped, tag = 'input window, operand 1, single buffered']
    #allocation5 [shape = 's32[1]{0}', space=sflag, size = 0x4, scoped, tag = 'scoped memory for tpu_custom_call.1']
    #allocation6 [shape = 'u8[8192]{0}', space=vmem, size = 0x2000, scoped, tag = 'input window, operand 2, single buffered']
    %10 = vsyncpa [#allocation3], 0
    %s11 = scalar_lea.sflag [#allocation3], 1
    %12 = vsyncpa %s11, 0
    %13 = vsyncpa [#allocation5], 0
    loop: start=0, step=1, limit=4
    $region2: #{tpu_custom_call.1} parent=1 // loop_pre_header
      _
    $region3: #{tpu_custom_call.1} parent=1 // loop_header
      %s15 = sphi 0, %s19
      %p16 = scmp.ge.s32.totalorder %s15, 4
      %s22 = sphi 0, %s41
      %s23 = sphi 0, %s37
      %s24 = sphi 0, %s33
      %s25 = sphi 0, %s22
      %s26 = sphi 0, %s23
      %s27 = sphi 0, %s24
      %s28 = sphi 0, %s25
      %s29 = sphi 0, %s26
      %s30 = sphi 0, %s27
      %s46 = sphi 0, %s48
      %s49 = sphi 0, %s46
      %s50 = sphi 0, %s49
      %s66 = sphi 0, %s50
      %s72 = sphi 0, %s74
      %s75 = sphi 0, %s72
      %s76 = sphi 0, %s75
      %s92 = sphi 0, %s76
      %s98 = sphi 0, %s100
      %s101 = sphi 0, %s98
      %s102 = sphi 0, %s101
      %s118 = sphi 0, %s102
      %s128 = sphi 0, %s130
      %s131 = sphi 0, %s128
      %s132 = sphi 0, %s131
      %s148 = sphi 0, %s132
      %s158 = sphi 0, %s160
      %s161 = sphi 0, %s158
      %s162 = sphi 0, %s161
      %s178 = sphi 0, %s162
    $region4: #{tpu_custom_call.1} parent=1 // loop_header_branch
      %18 = sbr.rel (%p16) target = $region8
    $region5: #{tpu_custom_call.1} parent=1 // loop_body
      %s20 = ssub.s32 %s15, 1
      %s21 = ssub.s32 %s15, 2
      %s31 = sadd.s32 1, %s24
      %p32 = scmp.ge.s32.totalorder %s31, 1
      %s33 = scalar_select %p32, 0, %s31
      %s34 = sadd.s32 1, %s23
      %s35 = scalar_select %p32, %s34, %s23
      %p36 = scmp.ge.s32.totalorder %s35, 1
      %s37 = scalar_select %p36, 0, %s35
      %s38 = sadd.s32 1, %s22
      %s39 = scalar_select %p36, %s38, %s22
      %p40 = scmp.ge.s32.totalorder %s39, 2
      %s41 = scalar_select %p40, 0, %s39
      %s42 = ssub.s32 %s22, %s41
      %s43 = ssub.s32 %s23, %s37
      %s44 = sor.u32 %s42, %s43
      %p45 = scmp.eq.s32.totalorder %s44, 0
      %s47 = sadd.s32 %s46, 1
      %s48 = scalar_select %p45, %s46, %s47
      %p51 = pneg %p45
      %p52 = scmp.eq.s32.totalorder %s15, 1
      %p53 = por %p51, %p52
      %p54 = scmp.ne.s32.totalorder %s46, %s49
      %p55 = scmp.eq.s32.totalorder %s15, 0
      %p56 = por %p54, %p55
      %p57 = scmp.ne.s32.totalorder %s46, %s49
      %p58 = scmp.eq.s32.totalorder %s20, 1
      %p59 = por %p57, %p58
      %p60 = scmp.ne.s32.totalorder %s49, %s50
      %p61 = scmp.eq.s32.totalorder %s20, 0
      %p62 = por %p60, %p61
      %p63 = scmp.ne.s32.totalorder %s49, %s50
      %p64 = scmp.eq.s32.totalorder %s21, 1
      %p65 = por %p63, %p64
      %p67 = scmp.ne.s32.totalorder %s50, %s66
      %p68 = scmp.eq.s32.totalorder %s21, 0
      %p69 = por %p67, %p68
      %s70 = ssub.s32 %s24, %s33
      %p71 = scmp.eq.s32.totalorder %s70, 0
      %s73 = sadd.s32 %s72, 1
      %s74 = scalar_select %p71, %s72, %s73
      %p77 = pneg %p71
      %p78 = scmp.eq.s32.totalorder %s15, 1
      %p79 = por %p77, %p78
      %p80 = scmp.ne.s32.totalorder %s72, %s75
      %p81 = scmp.eq.s32.totalorder %s15, 0
      %p82 = por %p80, %p81
      %p83 = scmp.ne.s32.totalorder %s72, %s75
      %p84 = scmp.eq.s32.totalorder %s20, 1
      %p85 = por %p83, %p84
      %p86 = scmp.ne.s32.totalorder %s75, %s76
      %p87 = scmp.eq.s32.totalorder %s20, 0
      %p88 = por %p86, %p87
      %p89 = scmp.ne.s32.totalorder %s75, %s76
      %p90 = scmp.eq.s32.totalorder %s21, 1
      %p91 = por %p89, %p90
      %p93 = scmp.ne.s32.totalorder %s76, %s92
      %p94 = scmp.eq.s32.totalorder %s21, 0
      %p95 = por %p93, %p94
      %s96 = ssub.s32 %s24, %s33
      %p97 = scmp.eq.s32.totalorder %s96, 0
      %s99 = sadd.s32 %s98, 1
      %s100 = scalar_select %p97, %s98, %s99
      %p103 = pneg %p97
      %p104 = scmp.eq.s32.totalorder %s15, 1
      %p105 = por %p103, %p104
      %p106 = scmp.ne.s32.totalorder %s98, %s101
      %p107 = scmp.eq.s32.totalorder %s15, 0
      %p108 = por %p106, %p107
      %p109 = scmp.ne.s32.totalorder %s98, %s101
      %p110 = scmp.eq.s32.totalorder %s20, 1
      %p111 = por %p109, %p110
      %p112 = scmp.ne.s32.totalorder %s101, %s102
      %p113 = scmp.eq.s32.totalorder %s20, 0
      %p114 = por %p112, %p113
      %p115 = scmp.ne.s32.totalorder %s101, %s102
      %p116 = scmp.eq.s32.totalorder %s21, 1
      %p117 = por %p115, %p116
      %p119 = scmp.ne.s32.totalorder %s102, %s118
      %p120 = scmp.eq.s32.totalorder %s21, 0
      %p121 = por %p119, %p120
      %s122 = ssub.s32 %s22, %s41
      %s123 = ssub.s32 %s24, %s33
      %s124 = sor.u32 %s122, %s123
      %s125 = ssub.s32 %s23, %s37
      %s126 = sor.u32 %s124, %s125
      %p127 = scmp.eq.s32.totalorder %s126, 0
      %s129 = sadd.s32 %s128, 1
      %s130 = scalar_select %p127, %s128, %s129
      %p133 = pneg %p127
      %p134 = scmp.eq.s32.totalorder %s15, 1
      %p135 = por %p133, %p134
      %p136 = scmp.ne.s32.totalorder %s128, %s131
      %p137 = scmp.eq.s32.totalorder %s15, 0
      %p138 = por %p136, %p137
      %p139 = scmp.ne.s32.totalorder %s128, %s131
      %p140 = scmp.eq.s32.totalorder %s20, 1
      %p141 = por %p139, %p140
      %p142 = scmp.ne.s32.totalorder %s131, %s132
      %p143 = scmp.eq.s32.totalorder %s20, 0
      %p144 = por %p142, %p143
      %p145 = scmp.ne.s32.totalorder %s131, %s132
      %p146 = scmp.eq.s32.totalorder %s21, 1
      %p147 = por %p145, %p146
      %p149 = scmp.ne.s32.totalorder %s132, %s148
      %p150 = scmp.eq.s32.totalorder %s21, 0
      %p151 = por %p149, %p150
      %s152 = ssub.s32 %s22, %s41
      %s153 = ssub.s32 %s24, %s33
      %s154 = sor.u32 %s152, %s153
      %s155 = ssub.s32 %s23, %s37
      %s156 = sor.u32 %s154, %s155
      %p157 = scmp.eq.s32.totalorder %s156, 0
      %s159 = sadd.s32 %s158, 1
      %s160 = scalar_select %p157, %s158, %s159
      %p163 = pneg %p157
      %p164 = scmp.eq.s32.totalorder %s15, 1
      %p165 = por %p163, %p164
      %p166 = scmp.ne.s32.totalorder %s158, %s161
      %p167 = scmp.eq.s32.totalorder %s15, 0
      %p168 = por %p166, %p167
      %p169 = scmp.ne.s32.totalorder %s158, %s161
      %p170 = scmp.eq.s32.totalorder %s20, 1
      %p171 = por %p169, %p170
      %p172 = scmp.ne.s32.totalorder %s161, %s162
      %p173 = scmp.eq.s32.totalorder %s20, 0
      %p174 = por %p172, %p173
      %p175 = scmp.ne.s32.totalorder %s161, %s162
      %p176 = scmp.eq.s32.totalorder %s21, 1
      %p177 = por %p175, %p176
      %p179 = scmp.ne.s32.totalorder %s162, %s178
      %p180 = scmp.eq.s32.totalorder %s21, 0
      %p181 = por %p179, %p180
      %p182 = scmp.le.s32.totalorder 1, %s15
      %p183 = scmp.lt.s32.totalorder %s15, 3
      %p184 = pnand %p182, %p183
      %p185 = pneg %p184
      // Predicated region
      $region9: #{tpu_custom_call.1} parent=5 // pred_check
        _
      $region10: #{tpu_custom_call.1} parent=5 // pred_check_branch
        %187 = sbr.rel (%p184) target = $region12
      $region11: #{tpu_custom_call.1} parent=5 // pred_region
        %s188 = ssub.s32 %s15, 1
        // Predicated region
        $region13: #{tpu_custom_call.1} parent=11 // pred_check
          %p189 = pneg %p88
        $region14: #{tpu_custom_call.1} parent=11 // pred_check_branch
          %191 = sbr.rel (%p189) target = $region16
        $region15: #{tpu_custom_call.1} parent=11 // pred_region
          %s193 = ssub.s32 256, 256
          %194 = vsyncadd [#allocation5], %s193
          %s195 = smul.addr %s27, 4
          %s196 = smul.addr %s195, 64
          %s197 = scalar_lea.hbm %s1, %s196
          %s198 = sshll.u32 [#allocation4], 4
          %s199 = int_to_ptr.vmem [resolvable:$true] %s198
          %204 = dma.hbm_to_vmem [thread:$0]  %s197, 256, %s199, [#allocation5], 64, 64, 4
        $region16: #{tpu_custom_call.1} parent=11 // pred_fallthru
          _
        // Predicated region
        $region17: #{tpu_custom_call.1} parent=11 // pred_check
          %p205 = pneg %p114
        $region18: #{tpu_custom_call.1} parent=11 // pred_check_branch
          %207 = sbr.rel (%p205) target = $region20
        $region19: #{tpu_custom_call.1} parent=11 // pred_region
          %s209 = ssub.s32 256, 256
          %210 = vsyncadd [#allocation5], %s209
          %s211 = smul.addr %s27, 4
          %s212 = smul.addr %s211, 64
          %s213 = scalar_lea.hbm %s2, %s212
          %s214 = sshll.u32 [#allocation6], 4
          %s215 = int_to_ptr.vmem [resolvable:$true] %s214
          %220 = dma.hbm_to_vmem [thread:$0]  %s213, 256, %s215, [#allocation5], 64, 64, 4
        $region20: #{tpu_custom_call.1} parent=11 // pred_fallthru
          _
      $region12: #{tpu_custom_call.1} parent=5 // pred_fallthru
        _
      %p221 = scmp.lt.s32.totalorder %s15, 2
      // Predicated region
      $region21: #{tpu_custom_call.1} parent=5 // pred_check
        %p222 = pneg %p221
      $region22: #{tpu_custom_call.1} parent=5 // pred_check_branch
        %224 = sbr.rel (%p222) target = $region24
      $region23: #{tpu_custom_call.1} parent=5 // pred_region
        // Predicated region
        $region25: #{tpu_custom_call.1} parent=23 // pred_check
          %p225 = pneg %p56
        $region26: #{tpu_custom_call.1} parent=23 // pred_check_branch
          %227 = sbr.rel (%p225) target = $region28
        $region27: #{tpu_custom_call.1} parent=23 // pred_region
          %s228 = sand.u32 %s46, 1
          %s229 = scalar_lea.sflag [#allocation3], %s228
          %s230 = sand.u32 %s46, 1
          %s231 = smul.addr %s230, 8
          %s232 = scalar_lea.vmem [#allocation2], %s231
          %s233 = smul.u32 2, %s23
          %s235 = ssub.s32 128, 128
          %236 = vsyncadd %s229, %s235
          %s237 = smul.addr %s22, 2
          %s238 = sadd.s32 %s233, %s237
          %s239 = smul.addr %s238, 64
          %s240 = scalar_lea.hbm %s0, %s239
          %s241 = sshll.u32 %s232, 4
          %s242 = int_to_ptr.vmem [resolvable:$true] %s241
          %247 = dma.hbm_to_vmem [thread:$0]  %s240, 128, %s242, %s229, 64, 64, 4
        $region28: #{tpu_custom_call.1} parent=23 // pred_fallthru
          _
      $region24: #{tpu_custom_call.1} parent=5 // pred_fallthru
        _
      %p248 = scmp.le.s32.totalorder 1, %s15
      %p249 = scmp.lt.s32.totalorder %s15, 3
      %p250 = pnand %p248, %p249
      %p251 = pneg %p250
      // Predicated region
      $region29: #{tpu_custom_call.1} parent=5 // pred_check
        _
      $region30: #{tpu_custom_call.1} parent=5 // pred_check_branch
        %253 = sbr.rel (%p250) target = $region32
      $region31: #{tpu_custom_call.1} parent=5 // pred_region
        %s254 = ssub.s32 %s15, 1
        %s255 = sand.u32 %s49, 1
        %s256 = scalar_lea.sflag [#allocation3], %s255
        %s257 = sand.u32 %s49, 1
        %s258 = smul.addr %s257, 8
        %s259 = scalar_lea.vmem [#allocation2], %s258
        // Predicated region
        $region33: #{tpu_custom_call.1} parent=31 // pred_check
          %p260 = pneg %p62
        $region34: #{tpu_custom_call.1} parent=31 // pred_check_branch
          %262 = sbr.rel (%p260) target = $region36
        $region35: #{tpu_custom_call.1} parent=31 // pred_region
          %263 = dma.done %s256, 128
        $region36: #{tpu_custom_call.1} parent=31 // pred_fallthru
          _
        // Predicated region
        $region37: #{tpu_custom_call.1} parent=31 // pred_check
          %p264 = pneg %p88
        $region38: #{tpu_custom_call.1} parent=31 // pred_check_branch
          %266 = sbr.rel (%p264) target = $region40
        $region39: #{tpu_custom_call.1} parent=31 // pred_region
          %267 = dma.done [#allocation5], 256
        $region40: #{tpu_custom_call.1} parent=31 // pred_fallthru
          _
        // Predicated region
        $region41: #{tpu_custom_call.1} parent=31 // pred_check
          %p268 = pneg %p114
        $region42: #{tpu_custom_call.1} parent=31 // pred_check_branch
          %270 = sbr.rel (%p268) target = $region44
        $region43: #{tpu_custom_call.1} parent=31 // pred_region
          %271 = dma.done [#allocation5], 256
        $region44: #{tpu_custom_call.1} parent=31 // pred_fallthru
          _
        %s272 = sand.u32 %s49, 1
        %s273 = scalar_lea.sflag [#allocation3], %s272
        %s274 = sand.u32 %s49, 1
        %s275 = smul.addr %s274, 8
        %s276 = scalar_lea.vmem [#allocation2], %s275
        %p277 = pneg %p62
        %p278 = pneg %p59
        %p279 = pneg %p88
        %p280 = pneg %p85
        %p281 = pneg %p114
        %p282 = pneg %p111
        %p283 = pneg %p144
        %p284 = pneg %p141
        %s285 = smul.u32 8, %s27
        %s286 = smul.u32 2, %s26
        %p287 = scmp.lt.s32.totalorder %s25, 1
        %s288 = scalar_select %p287, %s25, 1
        %p289 = scmp.lt.s32.totalorder %s285, 7
        %s290 = scalar_select %p289, %s285, 7
        %p291 = scmp.lt.s32.totalorder %s286, 1
        %s292 = scalar_select %p291, %s286, 1
        %s293 = smul.addr %s290, 2
        %s294 = sadd.s32 %s292, %s293
        %s295 = smul.addr %s288, 16
        %s296 = sadd.s32 %s294, %s295
        %s297 = smul.addr %s296, 4
        %s298 = scalar_lea.vmem %s3, %s297
        %p299 = pneg %p174
        %p300 = pneg %p171
        %s301 = smul.u32 8, %s27
        %s302 = smul.u32 2, %s26
        %p303 = scmp.lt.s32.totalorder %s25, 1
        %s304 = scalar_select %p303, %s25, 1
        %p305 = scmp.lt.s32.totalorder %s301, 7
        %s306 = scalar_select %p305, %s301, 7
        %p307 = scmp.lt.s32.totalorder %s302, 1
        %s308 = scalar_select %p307, %s302, 1
        %s309 = smul.addr %s306, 2
        %s310 = sadd.s32 %s308, %s309
        %s311 = smul.addr %s304, 16
        %s312 = sadd.s32 %s310, %s311
        %s313 = smul.addr %s312, 4
        %s314 = scalar_lea.vmem %s4, %s313
        %s315 = smul.u32 2, %s26
        %s316 = smul.u32 8, %s27
        %s317 = smul.u32 2, %s26
        %p318 = scmp.lt.s32.totalorder %s25, 1
        %s319 = scalar_select %p318, %s25, 1
        %p320 = scmp.lt.s32.totalorder %s316, 7
        %s321 = scalar_select %p320, %s316, 7
        %p322 = scmp.lt.s32.totalorder %s317, 1
        %s323 = scalar_select %p322, %s317, 1
        %s324 = smul.addr %s321, 2
        %s325 = sadd.s32 %s323, %s324
        %s326 = smul.addr %s319, 16
        %s327 = sadd.s32 %s325, %s326
        %s328 = smul.addr %s327, 4
        %s329 = scalar_lea.vmem %s3, %s328
        %s330 = smul.u32 8, %s27
        %s331 = smul.u32 2, %s26
        %s332 = smul.u32 8, %s27
        %s333 = smul.u32 2, %s26
        %p334 = scmp.lt.s32.totalorder %s25, 1
        %s335 = scalar_select %p334, %s25, 1
        %p336 = scmp.lt.s32.totalorder %s332, 7
        %s337 = scalar_select %p336, %s332, 7
        %p338 = scmp.lt.s32.totalorder %s333, 1
        %s339 = scalar_select %p338, %s333, 1
        %s340 = smul.addr %s337, 2
        %s341 = sadd.s32 %s339, %s340
        %s342 = smul.addr %s335, 16
        %s343 = sadd.s32 %s341, %s342
        %s344 = smul.addr %s343, 4
        %s345 = scalar_lea.vmem %s4, %s344
        %s346 = smul.u32 8, %s27
        %s347 = smul.u32 2, %s26
        %v349 = vld [vmem:[%s259] sm:$0xf]
        %v350 = vld [vmem:[%s259 + $0x4] sm:$0xf]
        %v351 = vld [vmem:[#allocation4] sm:$0xf]
        %v352 = vld [vmem:[#allocation4 + $0x4] sm:$0xf]
        %v353 = vld [vmem:[#allocation4 + $0x8] sm:$0xf]
        %v354 = vld [vmem:[#allocation4 + $0xc] sm:$0xf]
        %v357 = vunpack.c.l.b16 %v349
        %v358 = vunpack.c.l.b16 %v350
        %v359 = vpack.c.b16 %v358, %v357
        %v364 = vunpack.c.l.b16 %v351
        %v365 = vunpack.c.l.b16 %v352
        %v366 = vunpack.c.l.b16 %v353
        %v367 = vunpack.c.l.b16 %v354
        %v368 = vpack.c.b16 %v365, %v364
        %v369 = vpack.c.b16 %v367, %v366
        %vm372 = vcmask 261120
        %v374 = vsel %vm372, %v359, 0
        %376 = vmatprep.subr.bf16.mxu0 0
        %377 = vmatpush1.bf16.msra.mxu0 0
        %378 = vmatprep.subr.bf16.mxu0 0
        %379 = vmatpush1.bf16.msra.mxu0 0
        %380 = vmatprep.subr.bf16.mxu0 0
        %381 = vmatpush1.bf16.msra.mxu0 0
        %382 = vmatprep.subr.bf16.mxu0 0
        %383 = vmatpush1.bf16.msra.mxu0 0
        %384 = vmatprep.subr.bf16.mxu0 0
        %385 = vmatpush1.bf16.msra.mxu0 0
        %386 = vmatprep.subr.bf16.mxu0 0
        %387 = vmatpush1.bf16.msra.mxu0 0
        %388 = vmatprep.subr.bf16.mxu0 0
        %389 = vmatpush1.bf16.msra.mxu0 %v369
        %390 = vmatprep.subr.bf16.mxu0 0
        %391 = vmatpush1.bf16.msra.mxu0 %v368
        %392 = vmatprep.subr.bf16.mxu0 0
        %393 = vmatpush2.bf16.msra.mxu0 0
        %394 = vmatprep.subr.bf16.mxu0 0
        %395 = vmatpush2.bf16.msra.mxu0 0
        %396 = vmatprep.subr.bf16.mxu0 0
        %397 = vmatpush2.bf16.msra.mxu0 0
        %398 = vmatprep.subr.bf16.mxu0 0
        %399 = vmatpush2.bf16.msra.mxu0 0
        %400 = vmatprep.subr.bf16.mxu0 0
        %401 = vmatpush2.bf16.msra.mxu0 0
        %402 = vmatprep.subr.bf16.mxu0 0
        %403 = vmatpush2.bf16.msra.mxu0 0
        %404 = vmatprep.subr.bf16.mxu0 0
        %405 = vmatpush2.bf16.msra.mxu0 0
        %406 = vmatprep.subr.bf16.mxu0 0
        %407 = vmatpush2.bf16.msra.mxu0 0
        %408 = vmatprep.mubr.bf16.mxu0 0
        %409 = vmatmul.mubr.bf16.gmra.mxu0 %v374
        %v410 = vpop.f32.mrf.mxu0
        %v411 = vadd.f32 0.0, %v410
        %v412 = vpop.f32.mrf.mxu0
        %v413 = vpop.f32.mrf.mxu0
        %v414 = vadd.f32 0.0, %v413
        %v415 = vpop.f32.mrf.mxu0
        %416 = vdwg.mxu0
        %v417 = vpack.c.bf16 %v414, %v411
        %v419 = vunpack.c.l.b16 %v417
        %v420 = vunpack.c.h.b16 %v417
        %v421 = vpack.c.b16 %v419, %v419
        %v422 = vpack.c.b16 %v420, %v420
        %vm425 = vcmask 27648
        %426 = vst.msk [vmem:[%s329] sm:$0xf] %vm425, %v421
        %427 = vst.msk [vmem:[%s329 + $0x4] sm:$0xf] %vm425, %v422
        %428 = vrot.lane.b32.xlu0 %v421, 124
        %v429 = vpop.permute.xlu0 %428
        %430 = vrot.lane.b32.xlu0 %v422, 124
        %v431 = vpop.permute.xlu0 %430
        %s434 = scalar_lea.vmem %s329, 8
        %435 = vst.msk [vmem:[%s434] sm:$0xf] %vm425, %v429
        %436 = vst.msk [vmem:[%s434 + $0x4] sm:$0xf] %vm425, %v431
        %437 = vrot.lane.b32.xlu0 %v421, 120
        %v438 = vpop.permute.xlu0 %437
        %439 = vrot.lane.b32.xlu0 %v422, 120
        %v440 = vpop.permute.xlu0 %439
        %s443 = scalar_lea.vmem %s329, 16
        %444 = vst.msk [vmem:[%s443] sm:$0xf] %vm425, %v438
        %445 = vst.msk [vmem:[%s443 + $0x4] sm:$0xf] %vm425, %v440
        %446 = vrot.lane.b32.xlu0 %v421, 116
        %v447 = vpop.permute.xlu0 %446
        %448 = vrot.lane.b32.xlu0 %v422, 116
        %v449 = vpop.permute.xlu0 %448
        %s452 = scalar_lea.vmem %s329, 24
        %453 = vst.msk [vmem:[%s452] sm:$0xf] %vm425, %v447
        %454 = vst.msk [vmem:[%s452 + $0x4] sm:$0xf] %vm425, %v449
        %455 = vrot.lane.b32.xlu0 %v421, 112
        %v456 = vpop.permute.xlu0 %455
        %457 = vrot.lane.b32.xlu0 %v422, 112
        %v458 = vpop.permute.xlu0 %457
        %s461 = scalar_lea.vmem %s329, 32
        %462 = vst.msk [vmem:[%s461] sm:$0xf] %vm425, %v456
        %463 = vst.msk [vmem:[%s461 + $0x4] sm:$0xf] %vm425, %v458
        %464 = vrot.lane.b32.xlu0 %v421, 108
        %v465 = vpop.permute.xlu0 %464
        %466 = vrot.lane.b32.xlu0 %v422, 108
        %v467 = vpop.permute.xlu0 %466
        %s470 = scalar_lea.vmem %s329, 40
        %471 = vst.msk [vmem:[%s470] sm:$0xf] %vm425, %v465
        %472 = vst.msk [vmem:[%s470 + $0x4] sm:$0xf] %vm425, %v467
        %473 = vrot.lane.b32.xlu0 %v421, 104
        %v474 = vpop.permute.xlu0 %473
        %475 = vrot.lane.b32.xlu0 %v422, 104
        %v476 = vpop.permute.xlu0 %475
        %s479 = scalar_lea.vmem %s329, 48
        %480 = vst.msk [vmem:[%s479] sm:$0xf] %vm425, %v474
        %481 = vst.msk [vmem:[%s479 + $0x4] sm:$0xf] %vm425, %v476
        %482 = vrot.lane.b32.xlu0 %v421, 100
        %v483 = vpop.permute.xlu0 %482
        %484 = vrot.lane.b32.xlu0 %v422, 100
        %v485 = vpop.permute.xlu0 %484
        %s488 = scalar_lea.vmem %s329, 56
        %489 = vst.msk [vmem:[%s488] sm:$0xf] %vm425, %v483
        %490 = vst.msk [vmem:[%s488 + $0x4] sm:$0xf] %vm425, %v485
        %v491 = vld [vmem:[#allocation6] sm:$0xf]
        %v492 = vld [vmem:[#allocation6 + $0x4] sm:$0xf]
        %v493 = vld [vmem:[#allocation6 + $0x8] sm:$0xf]
        %v494 = vld [vmem:[#allocation6 + $0xc] sm:$0xf]
        %v499 = vunpack.c.l.b16 %v491
        %v500 = vunpack.c.l.b16 %v492
        %v501 = vunpack.c.l.b16 %v493
        %v502 = vunpack.c.l.b16 %v494
        %v503 = vpack.c.b16 %v500, %v499
        %v504 = vpack.c.b16 %v502, %v501
        %507 = vmatprep.subr.bf16.mxu0 0
        %508 = vmatpush1.bf16.msra.mxu0 0
        %509 = vmatprep.subr.bf16.mxu0 0
        %510 = vmatpush1.bf16.msra.mxu0 0
        %511 = vmatprep.subr.bf16.mxu0 0
        %512 = vmatpush1.bf16.msra.mxu0 0
        %513 = vmatprep.subr.bf16.mxu0 0
        %514 = vmatpush1.bf16.msra.mxu0 0
        %515 = vmatprep.subr.bf16.mxu0 0
        %516 = vmatpush1.bf16.msra.mxu0 0
        %517 = vmatprep.subr.bf16.mxu0 0
        %518 = vmatpush1.bf16.msra.mxu0 0
        %519 = vmatprep.subr.bf16.mxu0 0
        %520 = vmatpush1.bf16.msra.mxu0 %v504
        %521 = vmatprep.subr.bf16.mxu0 0
        %522 = vmatpush1.bf16.msra.mxu0 %v503
        %523 = vmatprep.subr.bf16.mxu0 0
        %524 = vmatpush2.bf16.msra.mxu0 0
        %525 = vmatprep.subr.bf16.mxu0 0
        %526 = vmatpush2.bf16.msra.mxu0 0
        %527 = vmatprep.subr.bf16.mxu0 0
        %528 = vmatpush2.bf16.msra.mxu0 0
        %529 = vmatprep.subr.bf16.mxu0 0
        %530 = vmatpush2.bf16.msra.mxu0 0
        %531 = vmatprep.subr.bf16.mxu0 0
        %532 = vmatpush2.bf16.msra.mxu0 0
        %533 = vmatprep.subr.bf16.mxu0 0
        %534 = vmatpush2.bf16.msra.mxu0 0
        %535 = vmatprep.subr.bf16.mxu0 0
        %536 = vmatpush2.bf16.msra.mxu0 0
        %537 = vmatprep.subr.bf16.mxu0 0
        %538 = vmatpush2.bf16.msra.mxu0 0
        %539 = vmatprep.mubr.bf16.mxu0 0
        %540 = vmatmul.mubr.bf16.gmra.mxu0 %v374
        %v541 = vpop.f32.mrf.mxu0
        %v542 = vadd.f32 0.0, %v541
        %v543 = vpop.f32.mrf.mxu0
        %v544 = vpop.f32.mrf.mxu0
        %v545 = vadd.f32 0.0, %v544
        %v546 = vpop.f32.mrf.mxu0
        %547 = vdwg.mxu0
        %v548 = vpack.c.bf16 %v545, %v542
        %v550 = vunpack.c.l.b16 %v548
        %v551 = vunpack.c.h.b16 %v548
        %v552 = vpack.c.b16 %v550, %v550
        %v553 = vpack.c.b16 %v551, %v551
        %556 = vst.msk [vmem:[%s345] sm:$0xf] %vm425, %v552
        %557 = vst.msk [vmem:[%s345 + $0x4] sm:$0xf] %vm425, %v553
        %558 = vrot.lane.b32.xlu0 %v552, 124
        %v559 = vpop.permute.xlu0 %558
        %560 = vrot.lane.b32.xlu0 %v553, 124
        %v561 = vpop.permute.xlu0 %560
        %s564 = scalar_lea.vmem %s345, 8
        %565 = vst.msk [vmem:[%s564] sm:$0xf] %vm425, %v559
        %566 = vst.msk [vmem:[%s564 + $0x4] sm:$0xf] %vm425, %v561
        %567 = vrot.lane.b32.xlu0 %v552, 120
        %v568 = vpop.permute.xlu0 %567
        %569 = vrot.lane.b32.xlu0 %v553, 120
        %v570 = vpop.permute.xlu0 %569
        %s573 = scalar_lea.vmem %s345, 16
        %574 = vst.msk [vmem:[%s573] sm:$0xf] %vm425, %v568
        %575 = vst.msk [vmem:[%s573 + $0x4] sm:$0xf] %vm425, %v570
        %576 = vrot.lane.b32.xlu0 %v552, 116
        %v577 = vpop.permute.xlu0 %576
        %578 = vrot.lane.b32.xlu0 %v553, 116
        %v579 = vpop.permute.xlu0 %578
        %s582 = scalar_lea.vmem %s345, 24
        %583 = vst.msk [vmem:[%s582] sm:$0xf] %vm425, %v577
        %584 = vst.msk [vmem:[%s582 + $0x4] sm:$0xf] %vm425, %v579
        %585 = vrot.lane.b32.xlu0 %v552, 112
        %v586 = vpop.permute.xlu0 %585
        %587 = vrot.lane.b32.xlu0 %v553, 112
        %v588 = vpop.permute.xlu0 %587
        %s591 = scalar_lea.vmem %s345, 32
        %592 = vst.msk [vmem:[%s591] sm:$0xf] %vm425, %v586
        %593 = vst.msk [vmem:[%s591 + $0x4] sm:$0xf] %vm425, %v588
        %594 = vrot.lane.b32.xlu0 %v552, 108
        %v595 = vpop.permute.xlu0 %594
        %596 = vrot.lane.b32.xlu0 %v553, 108
        %v597 = vpop.permute.xlu0 %596
        %s600 = scalar_lea.vmem %s345, 40
        %601 = vst.msk [vmem:[%s600] sm:$0xf] %vm425, %v595
        %602 = vst.msk [vmem:[%s600 + $0x4] sm:$0xf] %vm425, %v597
        %603 = vrot.lane.b32.xlu0 %v552, 104
        %v604 = vpop.permute.xlu0 %603
        %605 = vrot.lane.b32.xlu0 %v553, 104
        %v606 = vpop.permute.xlu0 %605
        %s609 = scalar_lea.vmem %s345, 48
        %610 = vst.msk [vmem:[%s609] sm:$0xf] %vm425, %v604
        %611 = vst.msk [vmem:[%s609 + $0x4] sm:$0xf] %vm425, %v606
        %612 = vrot.lane.b32.xlu0 %v552, 100
        %v613 = vpop.permute.xlu0 %612
        %614 = vrot.lane.b32.xlu0 %v553, 100
        %v615 = vpop.permute.xlu0 %614
        %s618 = scalar_lea.vmem %s345, 56
        %619 = vst.msk [vmem:[%s618] sm:$0xf] %vm425, %v613
        %620 = vst.msk [vmem:[%s618 + $0x4] sm:$0xf] %vm425, %v615
        %s621 = smul.u32 8, %s27
        %s622 = smul.u32 2, %s26
        %p623 = scmp.lt.s32.totalorder %s25, 1
        %s624 = scalar_select %p623, %s25, 1
        %p625 = scmp.lt.s32.totalorder %s621, 7
        %s626 = scalar_select %p625, %s621, 7
        %p627 = scmp.lt.s32.totalorder %s622, 1
        %s628 = scalar_select %p627, %s622, 1
        %s629 = smul.addr %s626, 2
        %s630 = sadd.s32 %s628, %s629
        %s631 = smul.addr %s624, 16
        %s632 = sadd.s32 %s630, %s631
        %s633 = smul.addr %s632, 4
        %s634 = scalar_lea.vmem %s3, %s633
        %s635 = smul.u32 8, %s27
        %s636 = smul.u32 2, %s26
        %p637 = scmp.lt.s32.totalorder %s25, 1
        %s638 = scalar_select %p637, %s25, 1
        %p639 = scmp.lt.s32.totalorder %s635, 7
        %s640 = scalar_select %p639, %s635, 7
        %p641 = scmp.lt.s32.totalorder %s636, 1
        %s642 = scalar_select %p641, %s636, 1
        %s643 = smul.addr %s640, 2
        %s644 = sadd.s32 %s642, %s643
        %s645 = smul.addr %s638, 16
        %s646 = sadd.s32 %s644, %s645
        %s647 = smul.addr %s646, 4
        %s648 = scalar_lea.vmem %s4, %s647
        // Predicated region
        $region45: #{tpu_custom_call.1} parent=31 // pred_check
          %p649 = pneg %p141
        $region46: #{tpu_custom_call.1} parent=31 // pred_check_branch
          %651 = sbr.rel (%p649) target = $region48
        $region47: #{tpu_custom_call.1} parent=31 // pred_region
          %s652 = smul.u32 8, %s27
          %s653 = smul.u32 2, %s26
        $region48: #{tpu_custom_call.1} parent=31 // pred_fallthru
          _
        // Predicated region
        $region49: #{tpu_custom_call.1} parent=31 // pred_check
          %p654 = pneg %p171
        $region50: #{tpu_custom_call.1} parent=31 // pred_check_branch
          %656 = sbr.rel (%p654) target = $region52
        $region51: #{tpu_custom_call.1} parent=31 // pred_region
          %s657 = smul.u32 8, %s27
          %s658 = smul.u32 2, %s26
        $region52: #{tpu_custom_call.1} parent=31 // pred_fallthru
          _
      $region32: #{tpu_custom_call.1} parent=5 // pred_fallthru
        _
      %p659 = scmp.le.s32.totalorder 2, %s15
      // Predicated region
      $region53: #{tpu_custom_call.1} parent=5 // pred_check
        %p660 = pneg %p659
      $region54: #{tpu_custom_call.1} parent=5 // pred_check_branch
        %662 = sbr.rel (%p660) target = $region56
      $region55: #{tpu_custom_call.1} parent=5 // pred_region
        %s663 = ssub.s32 %s15, 2
        // Predicated region
        $region57: #{tpu_custom_call.1} parent=55 // pred_check
          %p664 = pneg %p147
        $region58: #{tpu_custom_call.1} parent=55 // pred_check_branch
          %666 = sbr.rel (%p664) target = $region60
        $region59: #{tpu_custom_call.1} parent=55 // pred_region
          %s667 = smul.u32 8, %s30
          %s668 = smul.u32 2, %s29
          %p669 = scmp.lt.s32.totalorder %s28, 1
          %s670 = scalar_select %p669, %s28, 1
          %p671 = scmp.lt.s32.totalorder %s667, 7
          %s672 = scalar_select %p671, %s667, 7
          %p673 = scmp.lt.s32.totalorder %s668, 1
          %s674 = scalar_select %p673, %s668, 1
          %s675 = smul.addr %s672, 2
          %s676 = sadd.s32 %s674, %s675
          %s677 = smul.addr %s670, 16
          %s678 = sadd.s32 %s676, %s677
          %s679 = smul.addr %s678, 4
          %s680 = scalar_lea.vmem %s3, %s679
        $region60: #{tpu_custom_call.1} parent=55 // pred_fallthru
          _
        // Predicated region
        $region61: #{tpu_custom_call.1} parent=55 // pred_check
          %p681 = pneg %p177
        $region62: #{tpu_custom_call.1} parent=55 // pred_check_branch
          %683 = sbr.rel (%p681) target = $region64
        $region63: #{tpu_custom_call.1} parent=55 // pred_region
          %s684 = smul.u32 8, %s30
          %s685 = smul.u32 2, %s29
          %p686 = scmp.lt.s32.totalorder %s28, 1
          %s687 = scalar_select %p686, %s28, 1
          %p688 = scmp.lt.s32.totalorder %s684, 7
          %s689 = scalar_select %p688, %s684, 7
          %p690 = scmp.lt.s32.totalorder %s685, 1
          %s691 = scalar_select %p690, %s685, 1
          %s692 = smul.addr %s689, 2
          %s693 = sadd.s32 %s691, %s692
          %s694 = smul.addr %s687, 16
          %s695 = sadd.s32 %s693, %s694
          %s696 = smul.addr %s695, 4
          %s697 = scalar_lea.vmem %s4, %s696
        $region64: #{tpu_custom_call.1} parent=55 // pred_fallthru
          _
      $region56: #{tpu_custom_call.1} parent=5 // pred_fallthru
        _
    $region6: #{tpu_custom_call.1} parent=1 // loop_footer
      %s19 = sadd.s32 1, %s15
    $region7: #{tpu_custom_call.1} parent=1 // loop_footer_branch
      %14 = sbr.rel target = $region3
    $region8: #{tpu_custom_call.1} parent=1 // loop_exit
      _
    %698 = vsyncpa [#allocation3], 1
    %s699 = scalar_lea.sflag [#allocation3], 1
    %700 = vsyncpa %s699, 1
    %701 = vsyncpa [#allocation5], 1

</llo_original>
